<compile_context>
chip_gen: v7x
topology: tpu7x:2x2x1
jax: 0.10.0
libtpu: 0.0.40
codegen_flags: <defaults>
</compile_context>

<pallas_src>
import functools

import jax
import jax.numpy as jnp
from jax import lax
from jax.experimental import pallas as pl
from jax.experimental.pallas import tpu as pltpu


# ---------------------------------------------------------------------------
# in-kernel math helpers
# ---------------------------------------------------------------------------
def _layernorm(h, g, b, eps=1e-5):
    mu = jnp.mean(h, axis=-1, keepdims=True)
    var = jnp.mean((h - mu) ** 2, axis=-1, keepdims=True)
    return (h - mu) * lax.rsqrt(var + eps) * g + b


def _erf(x):
    # Abramowitz & Stegun 7.1.26 polynomial, |abs err| < 1.5e-7.
    # TODO(synk): nn.GELU uses exact erf; polynomial kept since lax.erf has no
    # guaranteed Mosaic lowering (error is far below the test tolerance).
    a1, a2, a3, a4, a5 = 0.254829592, -0.284496736, 1.421413741, -1.453152027, 1.061405429
    p = 0.3275911
    s = jnp.where(x >= 0.0, 1.0, -1.0)
    ax = jnp.abs(x)
    t = 1.0 / (1.0 + p * ax)
    poly = ((((a5 * t + a4) * t + a3) * t + a2) * t + a1) * t
    return s * (1.0 - poly * jnp.exp(-ax * ax))


def _gelu(x):
    return 0.5 * x * (1.0 + _erf(x * 0.7071067811865476))


# ---------------------------------------------------------------------------
# Pallas kernel: one Decoder block.
#   grid = (batch_blocks, ffn_hidden_tiles)
#   activations arrive as a flat (NB*S, E) slab so every dense matmul sees
#   NB*S rows on the MXU; the (S,S) attention core loops (batch, head).
# ---------------------------------------------------------------------------
def decoder_kernel(x_ref, g1_ref, be1_ref, wqkv_ref, bqkv_ref,
                   g2_ref, be2_ref, w1_ref, b1_ref, w2_ref, b2_ref,
                   o_ref, h2_ref, acc_ref, *, n_heads, nb, seq_len):
    S = seq_len
    E = x_ref.shape[1]
    D = E // n_heads
    f = pl.program_id(1)
    nf = pl.num_programs(1)

    # ---- attention branch + residual: only on the first FFN tile -----------
    @pl.when(f == 0)
    def _attention():
        x = x_ref[...]                                            # (NB*S, E) f32
        h1 = _layernorm(x, g1_ref[0], be1_ref[0]).astype(jnp.bfloat16)
        # fused QKV projection (score scale already folded into Wq / bq);
        # cast the whole qkv slab to bf16 once (largest live intermediate).
        qkv = (jnp.dot(h1, wqkv_ref[...], preferred_element_type=jnp.float32)
               + bqkv_ref[0]).astype(jnp.bfloat16)                # (NB*S, 3E)

        # causal additive bias, generated once in-kernel (no HBM mask input)
        row = lax.broadcasted_iota(jnp.int32, (S, S), 0)
        col = lax.broadcasted_iota(jnp.int32, (S, S), 1)
        bias = jnp.where(row >= col, 0.0, -1e20).astype(jnp.float32)

        # TODO(synk): for n_heads >= 12 switch this static unroll to a
        # lax.fori_loop over a VMEM-staged qkv to bound vreg live ranges.
        x1_rows = []
        for b in range(nb):                                       # static unroll
            r0 = b * S
            head_outs = []
            for hi in range(n_heads):                             # static unroll
                qh = qkv[r0:r0 + S, hi * D:(hi + 1) * D]
                kh = qkv[r0:r0 + S, E + hi * D:E + (hi + 1) * D]
                vh = qkv[r0:r0 + S, 2 * E + hi * D:2 * E + (hi + 1) * D]
                # q . k^T without an explicit transpose
                att = lax.dot_general(qh, kh, (((1,), (1,)), ((), ())),
                                      preferred_element_type=jnp.float32) + bias
                att = att - jnp.max(att, axis=-1, keepdims=True)
                p = jnp.exp(att)
                p = p * pl.reciprocal(jnp.sum(p, axis=-1, keepdims=True),
                                      approx=True)
                head_outs.append(jnp.dot(p.astype(jnp.bfloat16), vh,
                                         preferred_element_type=jnp.float32))
            # one full-lane-width (S, E) value per batch row — no masked
            # per-head lane stores.  NOTE: reference never applies self.fc.
            attn_b = jnp.concatenate(head_outs, axis=-1)          # (S, E)
            x1_rows.append(x[r0:r0 + S, :] + attn_b)              # residual
        x1 = jnp.concatenate(x1_rows, axis=0)                     # (NB*S, E) f32

        # LN2 from the live value (no o_ref read-back); seed the f32 FFN
        # accumulator with the residual + the (once-only) w2 bias.
        h2_ref[...] = _layernorm(x1, g2_ref[0], be2_ref[0]).astype(jnp.bfloat16)
        acc_ref[...] = x1 + b2_ref[0]

    # ---- feed-forward branch: one (E, TF) / (TF, E) hidden tile per step ----
    t = jnp.dot(h2_ref[...], w1_ref[...],
                preferred_element_type=jnp.float32) + b1_ref[0]   # (NB*S, TF)
    t = _gelu(t)
    acc_ref[...] += jnp.dot(t.astype(jnp.bfloat16), w2_ref[...],
                            preferred_element_type=jnp.float32)   # f32 accum

    @pl.when(f == nf - 1)
    def _store():
        # single lane-dense store of the finished block
        o_ref[...] = acc_ref[...].astype(o_ref.dtype)


# ---------------------------------------------------------------------------
# wrapper: weight packing + pallas_call plumbing
# ---------------------------------------------------------------------------
def decoder_forward(x, p, n_heads, *, ffn_tile=512, batch_rows_target=256):
    N, S, E = x.shape
    F4 = p["w1"].shape[1]
    scale = 1.0 / (N ** 0.5)            # reference quirk: 1 / sqrt(batch_size)

    # FFN hidden-axis tile (multiple of 128, or the full axis as fallback)
    if F4 > ffn_tile and ffn_tile % 128 == 0 and F4 % ffn_tile == 0:
        TF = ffn_tile
    else:
        TF = F4
    NF = F4 // TF

    # batch tile: fold as many batch rows as possible into the matmul M dim
    # (largest divisor of N with NB*S <= target and a legal sublane block).
    NB = 1
    for c in range(1, N + 1):
        if N % c == 0 and c * S <= max(batch_rows_target, S) \
                and (c == N or (c * S) % 8 == 0):
            NB = c
    R = NB * S

    bf16 = jnp.bfloat16
    # fuse QKV; fold the score scale into the query weight/bias; cast to bf16
    wqkv = jnp.concatenate([p["wq"] * scale, p["wk"], p["wv"]], axis=1).astype(bf16)
    bqkv = jnp.concatenate([p["bq"] * scale, p["bk"], p["bv"]], axis=1)
    w1 = p["w1"].astype(bf16)
    w2 = p["w2"].astype(bf16)

    # flat (N*S, E) activation layout so the kernel's dense matmuls see NB*S rows
    x2d = x.reshape(N * S, E)

    # generation-aware VMEM budget (≈96 MiB on v5e/v6e, ≈48 MiB on v7x)
    try:
        vmem_cap = pltpu.get_tpu_info().vmem_capacity_bytes
    except Exception:
        vmem_cap = 64 * 1024 * 1024
    vmem_limit = min(int(vmem_cap) * 3 // 4, 100 * 1024 * 1024)

    const = lambda shape: pl.BlockSpec(shape, lambda b, f: (0, 0))
    kernel = functools.partial(decoder_kernel, n_heads=n_heads, nb=NB, seq_len=S)

    out2d = pl.pallas_call(
        kernel,
        out_shape=jax.ShapeDtypeStruct((N * S, E), x.dtype),
        grid=(N // NB, NF),
        in_specs=[
            pl.BlockSpec((R, E), lambda b, f: (b, 0)),            # x slab
            const((1, E)), const((1, E)),                         # LN1 gamma/beta
            const((E, 3 * E)), const((1, 3 * E)),                 # fused QKV
            const((1, E)), const((1, E)),                         # LN2 gamma/beta
            pl.BlockSpec((E, TF), lambda b, f: (0, f)),           # w1 tile
            pl.BlockSpec((1, TF), lambda b, f: (0, f)),           # b1 tile
            pl.BlockSpec((TF, E), lambda b, f: (f, 0)),           # w2 tile
            const((1, E)),                                        # b2
        ],
        out_specs=pl.BlockSpec((R, E), lambda b, f: (b, 0)),
        scratch_shapes=[pltpu.VMEM((R, E), jnp.bfloat16),         # LN2(x1), bf16
                        pltpu.VMEM((R, E), jnp.float32)],         # f32 accumulator
        compiler_params=pltpu.CompilerParams(
            dimension_semantics=("parallel", "arbitrary"),
            vmem_limit_bytes=vmem_limit,
        ),
    )(x2d, p["g1"], p["be1"], wqkv, bqkv, p["g2"], p["be2"],
      w1, p["b1"], w2, p["b2"])
    return out2d.reshape(N, S, E)


# ---------------------------------------------------------------------------
# deterministic parameter init (shapes follow the PyTorch module's __init__)
# ---------------------------------------------------------------------------
def init_params(key, E):
    ks = jax.random.split(key, 14)
    d = lambda k, shape, s=0.02: s * jax.random.normal(k, shape, jnp.float32)
    return {
        "g1": 1.0 + d(ks[0], (1, E), 0.1), "be1": d(ks[1], (1, E), 0.1),
        "wq": d(ks[2], (E, E)), "bq": d(ks[3], (1, E)),
        "wk": d(ks[4], (E, E)), "bk": d(ks[5], (1, E)),
        "wv": d(ks[6], (E, E)), "bv": d(ks[7], (1, E)),
        "g2": 1.0 + d(ks[8], (1, E), 0.1), "be2": d(ks[9], (1, E), 0.1),
        "w1": d(ks[10], (E, 4 * E)), "b1": d(ks[11], (1, 4 * E)),
        "w2": d(ks[12], (4 * E, E)), "b2": d(ks[13], (1, E)),
    }


# ---------------------------------------------------------------------------
# pure-JAX reference (mirrors the PyTorch Decoder.forward in eval mode)
# ---------------------------------------------------------------------------
def decoder_ref(x, p, n_heads):
    N, S, E = x.shape
    D = E // n_heads
    h = _layernorm(x, p["g1"], p["be1"])
    q = (h @ p["wq"] + p["bq"]).reshape(N, S, n_heads, D)
    k = (h @ p["wk"] + p["bk"]).reshape(N, S, n_heads, D)
    v = (h @ p["wv"] + p["bv"]).reshape(N, S, n_heads, D)
    att = jnp.einsum("nqhd,nkhd->nhqk", q, k) * (1.0 / N ** 0.5)
    mask = jnp.tril(jnp.ones((S, S), jnp.float32))
    att = jnp.where(mask == 0.0, -1e20, att)
    att = jax.nn.softmax(att, axis=-1)
    out = jnp.einsum("nhqk,nkhd->nqhd", att, v).reshape(N, S, E)
    x = x + out                                   # (self.fc never applied)
    h2 = _layernorm(x, p["g2"], p["be2"])
    ff = h2 @ p["w1"] + p["b1"]
    ff = 0.5 * ff * (1.0 + jax.scipy.special.erf(ff / jnp.sqrt(2.0)))
    ff = ff @ p["w2"] + p["b2"]
    return x + ff


if __name__ == "__main__":
    # small config: embedding_size=64, n_heads=4 (head dim 16), 4E=256;
    # batch N=2, sequence S=8.  ffn_tile=128 exercises the 2-tile FFN path,
    # and both batch rows fold into one (16, E) matmul slab.
    N, S, E, H = 2, 8, 64, 4

    key = jax.random.PRNGKey(0)
    pkey, xkey = jax.random.split(key)
    params = init_params(pkey, E)
    x = jax.random.normal(xkey, (N, S, E), jnp.float32)

    out = decoder_forward(x, params, H, ffn_tile=128)
    out = jax.block_until_ready(out)

    ref = decoder_ref(x, params, H)
    assert out.shape == (N, S, E), out.shape
    max_err = float(jnp.max(jnp.abs(out - ref)))
    # bf16 MXU inputs (f32 accumulation) => keep a bf16-appropriate tolerance
    assert bool(jnp.allclose(out, ref, atol=1e-2, rtol=1e-2)), max_err

    print("KERNEL_OK")
</pallas_src>

<mosaic_0001>
module attributes {stable_mosaic.version = 11 : i64} {
  func.func @decoder_kernel(%arg0: i32, %arg1: i32, %arg2: memref<16x64xf32, #tpu.memory_space<vmem>>, %arg3: memref<1x64xf32, #tpu.memory_space<vmem>>, %arg4: memref<1x64xf32, #tpu.memory_space<vmem>>, %arg5: memref<64x192xbf16, #tpu.memory_space<vmem>>, %arg6: memref<1x192xf32, #tpu.memory_space<vmem>>, %arg7: memref<1x64xf32, #tpu.memory_space<vmem>>, %arg8: memref<1x64xf32, #tpu.memory_space<vmem>>, %arg9: memref<64x128xbf16, #tpu.memory_space<vmem>>, %arg10: memref<1x128xf32, #tpu.memory_space<vmem>>, %arg11: memref<128x64xbf16, #tpu.memory_space<vmem>>, %arg12: memref<1x64xf32, #tpu.memory_space<vmem>>, %arg13: memref<16x64xf32, #tpu.memory_space<vmem>>, %arg14: memref<16x64xbf16, #tpu.memory_space<vmem>>, %arg15: memref<16x64xf32, #tpu.memory_space<vmem>>) attributes {dimension_semantics = [#tpu.dimension_semantics<parallel>, #tpu.dimension_semantics<arbitrary>], iteration_bounds = array<i64: 1, 2>, scalar_prefetch = 0 : i64, scratch_operands = 2 : i64, tpu.core_type = #tpu.core_type<tc>, window_params = [{transform_indices = @transform_0, window_bounds = array<i64: 16, 64>}, {pipeline_mode = #tpu.pipeline_mode<synchronous>, transform_indices = @transform_1, window_bounds = array<i64: 1, 64>}, {pipeline_mode = #tpu.pipeline_mode<synchronous>, transform_indices = @transform_2, window_bounds = array<i64: 1, 64>}, {pipeline_mode = #tpu.pipeline_mode<synchronous>, transform_indices = @transform_3, window_bounds = array<i64: 64, 192>}, {pipeline_mode = #tpu.pipeline_mode<synchronous>, transform_indices = @transform_4, window_bounds = array<i64: 1, 192>}, {pipeline_mode = #tpu.pipeline_mode<synchronous>, transform_indices = @transform_5, window_bounds = array<i64: 1, 64>}, {pipeline_mode = #tpu.pipeline_mode<synchronous>, transform_indices = @transform_6, window_bounds = array<i64: 1, 64>}, {transform_indices = @transform_7, window_bounds = array<i64: 64, 128>}, {transform_indices = @transform_8, window_bounds = array<i64: 1, 128>}, {transform_indices = @transform_9, window_bounds = array<i64: 128, 64>}, {pipeline_mode = #tpu.pipeline_mode<synchronous>, transform_indices = @transform_10, window_bounds = array<i64: 1, 64>}, {transform_indices = @transform_11, window_bounds = array<i64: 16, 64>}]} {
    %c0_i32 = arith.constant 0 : i32
    %0 = arith.cmpi eq, %arg1, %c0_i32 : i32
    %1 = arith.extui %0 : i1 to i32
    %c0_i32_0 = arith.constant 0 : i32
    %2 = arith.cmpi ne, %1, %c0_i32_0 : i32
    scf.if %2 {
      %c0_30 = arith.constant 0 : index
      %c0_31 = arith.constant 0 : index
      %61 = vector.load %arg2[%c0_30, %c0_31] : memref<16x64xf32, #tpu.memory_space<vmem>>, vector<16x64xf32>
      %c0_32 = arith.constant 0 : index
      %c0_33 = arith.constant 0 : index
      %62 = vector.load %arg3[%c0_32, %c0_33] : memref<1x64xf32, #tpu.memory_space<vmem>>, vector<1x64xf32>
      %63 = vector.shape_cast %62 : vector<1x64xf32> to vector<64xf32>
      %c0_34 = arith.constant 0 : index
      %c0_35 = arith.constant 0 : index
      %64 = vector.load %arg4[%c0_34, %c0_35] : memref<1x64xf32, #tpu.memory_space<vmem>>, vector<1x64xf32>
      %65 = vector.shape_cast %64 : vector<1x64xf32> to vector<64xf32>
      %cst_36 = arith.constant dense<0.000000e+00> : vector<16xf32>
      %66 = vector.multi_reduction <add>, %61, %cst_36 [1] : vector<16x64xf32> to vector<16xf32>
      %67 = vector.shape_cast %66 : vector<16xf32> to vector<16x1xf32>
      %cst_37 = arith.constant 6.400000e+01 : f32
      %68 = vector.broadcast %cst_37 : f32 to vector<16x1xf32>
      %69 = arith.divf %67, %68 : vector<16x1xf32>
      %70 = vector.broadcast %69 : vector<16x1xf32> to vector<16x64xf32>
      %71 = arith.subf %61, %70 : vector<16x64xf32>
      %72 = arith.mulf %71, %71 : vector<16x64xf32>
      %cst_38 = arith.constant dense<0.000000e+00> : vector<16xf32>
      %73 = vector.multi_reduction <add>, %72, %cst_38 [1] : vector<16x64xf32> to vector<16xf32>
      %74 = vector.shape_cast %73 : vector<16xf32> to vector<16x1xf32>
      %cst_39 = arith.constant 6.400000e+01 : f32
      %75 = vector.broadcast %cst_39 : f32 to vector<16x1xf32>
      %76 = arith.divf %74, %75 : vector<16x1xf32>
      %77 = vector.broadcast %69 : vector<16x1xf32> to vector<16x64xf32>
      %78 = arith.subf %61, %77 : vector<16x64xf32>
      %cst_40 = arith.constant 9.99999974E-6 : f32
      %79 = vector.broadcast %cst_40 : f32 to vector<16x1xf32>
      %80 = arith.addf %76, %79 : vector<16x1xf32>
      %81 = math.rsqrt %80 : vector<16x1xf32>
      %82 = vector.broadcast %81 : vector<16x1xf32> to vector<16x64xf32>
      %83 = arith.mulf %78, %82 : vector<16x64xf32>
      %84 = vector.shape_cast %63 : vector<64xf32> to vector<1x64xf32>
      %85 = vector.broadcast %84 : vector<1x64xf32> to vector<16x64xf32>
      %86 = arith.mulf %83, %85 : vector<16x64xf32>
      %87 = vector.shape_cast %65 : vector<64xf32> to vector<1x64xf32>
      %88 = vector.broadcast %87 : vector<1x64xf32> to vector<16x64xf32>
      %89 = arith.addf %86, %88 : vector<16x64xf32>
      %90 = arith.truncf %89 : vector<16x64xf32> to vector<16x64xbf16>
      %c0_41 = arith.constant 0 : index
      %c0_42 = arith.constant 0 : index
      %91 = vector.load %arg5[%c0_41, %c0_42] : memref<64x192xbf16, #tpu.memory_space<vmem>>, vector<64x192xbf16>
      %cst_43 = arith.constant dense<0.000000e+00> : vector<16x192xf32>
      %92 = tpu.matmul %90, %91, %cst_43 {dimension_numbers = #tpu.dot_dimension_numbers<[1], [0], [0], [1], [0, 0, 1, 1], [], []>} : vector<16x64xbf16>, vector<64x192xbf16>, vector<16x192xf32> -> vector<16x192xf32>
      %c0_44 = arith.constant 0 : index
      %c0_45 = arith.constant 0 : index
      %93 = vector.load %arg6[%c0_44, %c0_45] : memref<1x192xf32, #tpu.memory_space<vmem>>, vector<1x192xf32>
      %94 = vector.shape_cast %93 : vector<1x192xf32> to vector<192xf32>
      %95 = vector.shape_cast %94 : vector<192xf32> to vector<1x192xf32>
      %96 = vector.broadcast %95 : vector<1x192xf32> to vector<16x192xf32>
      %97 = arith.addf %92, %96 : vector<16x192xf32>
      %98 = arith.truncf %97 : vector<16x192xf32> to vector<16x192xbf16>
      %99 = tpu.iota {dimensions = array<i32: 0>} : vector<8x8xi32>
      %100 = tpu.iota {dimensions = array<i32: 1>} : vector<8x8xi32>
      %101 = arith.cmpi sge, %99, %100 : vector<8x8xi32>
      %cst_46 = arith.constant 0.000000e+00 : f32
      %cst_47 = arith.constant -1.000000e+20 : f32
      %102 = vector.broadcast %cst_46 : f32 to vector<8x8xf32>
      %103 = vector.broadcast %cst_47 : f32 to vector<8x8xf32>
      %104 = arith.select %101, %102, %103 : vector<8x8xi1>, vector<8x8xf32>
      %105 = vector.extract_strided_slice %98 {offsets = [0, 0], sizes = [8, 16], strides = [1, 1]} : vector<16x192xbf16> to vector<8x16xbf16>
      %106 = vector.extract_strided_slice %98 {offsets = [0, 64], sizes = [8, 16], strides = [1, 1]} : vector<16x192xbf16> to vector<8x16xbf16>
      %107 = vector.extract_strided_slice %98 {offsets = [0, 128], sizes = [8, 16], strides = [1, 1]} : vector<16x192xbf16> to vector<8x16xbf16>
      %cst_48 = arith.constant dense<0.000000e+00> : vector<8x8xf32>
      %108 = tpu.matmul %105, %106, %cst_48 {dimension_numbers = #tpu.dot_dimension_numbers<[1], [1], [0], [0], [0, 0, 1, 0], [], []>} : vector<8x16xbf16>, vector<8x16xbf16>, vector<8x8xf32> -> vector<8x8xf32>
      %109 = arith.addf %108, %104 : vector<8x8xf32>
      %cst_49 = arith.constant dense<0xFF800000> : vector<8xf32>
      %110 = vector.multi_reduction <maximumf>, %109, %cst_49 [1] : vector<8x8xf32> to vector<8xf32>
      %111 = vector.shape_cast %110 : vector<8xf32> to vector<8x1xf32>
      %112 = vector.broadcast %111 : vector<8x1xf32> to vector<8x8xf32>
      %113 = arith.subf %109, %112 : vector<8x8xf32>
      %114 = math.exp %113 : vector<8x8xf32>
      %cst_50 = arith.constant dense<0.000000e+00> : vector<8xf32>
      %115 = vector.multi_reduction <add>, %114, %cst_50 [1] : vector<8x8xf32> to vector<8xf32>
      %116 = vector.shape_cast %115 : vector<8xf32> to vector<8x1xf32>
      %117 = tpu.reciprocal %116 {approx = true} : vector<8x1xf32> -> vector<8x1xf32>
      %118 = vector.broadcast %117 : vector<8x1xf32> to vector<8x8xf32>
      %119 = arith.mulf %114, %118 : vector<8x8xf32>
      %120 = arith.truncf %119 : vector<8x8xf32> to vector<8x8xbf16>
      %cst_51 = arith.constant dense<0.000000e+00> : vector<8x16xf32>
      %121 = tpu.matmul %120, %107, %cst_51 {dimension_numbers = #tpu.dot_dimension_numbers<[1], [0], [0], [1], [0, 0, 1, 1], [], []>} : vector<8x8xbf16>, vector<8x16xbf16>, vector<8x16xf32> -> vector<8x16xf32>
      %122 = vector.extract_strided_slice %98 {offsets = [0, 16], sizes = [8, 16], strides = [1, 1]} : vector<16x192xbf16> to vector<8x16xbf16>
      %123 = vector.extract_strided_slice %98 {offsets = [0, 80], sizes = [8, 16], strides = [1, 1]} : vector<16x192xbf16> to vector<8x16xbf16>
      %124 = vector.extract_strided_slice %98 {offsets = [0, 144], sizes = [8, 16], strides = [1, 1]} : vector<16x192xbf16> to vector<8x16xbf16>
      %cst_52 = arith.constant dense<0.000000e+00> : vector<8x8xf32>
      %125 = tpu.matmul %122, %123, %cst_52 {dimension_numbers = #tpu.dot_dimension_numbers<[1], [1], [0], [0], [0, 0, 1, 0], [], []>} : vector<8x16xbf16>, vector<8x16xbf16>, vector<8x8xf32> -> vector<8x8xf32>
      %126 = arith.addf %125, %104 : vector<8x8xf32>
      %cst_53 = arith.constant dense<0xFF800000> : vector<8xf32>
      %127 = vector.multi_reduction <maximumf>, %126, %cst_53 [1] : vector<8x8xf32> to vector<8xf32>
      %128 = vector.shape_cast %127 : vector<8xf32> to vector<8x1xf32>
      %129 = vector.broadcast %128 : vector<8x1xf32> to vector<8x8xf32>
      %130 = arith.subf %126, %129 : vector<8x8xf32>
      %131 = math.exp %130 : vector<8x8xf32>
      %cst_54 = arith.constant dense<0.000000e+00> : vector<8xf32>
      %132 = vector.multi_reduction <add>, %131, %cst_54 [1] : vector<8x8xf32> to vector<8xf32>
      %133 = vector.shape_cast %132 : vector<8xf32> to vector<8x1xf32>
      %134 = tpu.reciprocal %133 {approx = true} : vector<8x1xf32> -> vector<8x1xf32>
      %135 = vector.broadcast %134 : vector<8x1xf32> to vector<8x8xf32>
      %136 = arith.mulf %131, %135 : vector<8x8xf32>
      %137 = arith.truncf %136 : vector<8x8xf32> to vector<8x8xbf16>
      %cst_55 = arith.constant dense<0.000000e+00> : vector<8x16xf32>
      %138 = tpu.matmul %137, %124, %cst_55 {dimension_numbers = #tpu.dot_dimension_numbers<[1], [0], [0], [1], [0, 0, 1, 1], [], []>} : vector<8x8xbf16>, vector<8x16xbf16>, vector<8x16xf32> -> vector<8x16xf32>
      %139 = vector.extract_strided_slice %98 {offsets = [0, 32], sizes = [8, 16], strides = [1, 1]} : vector<16x192xbf16> to vector<8x16xbf16>
      %140 = vector.extract_strided_slice %98 {offsets = [0, 96], sizes = [8, 16], strides = [1, 1]} : vector<16x192xbf16> to vector<8x16xbf16>
      %141 = vector.extract_strided_slice %98 {offsets = [0, 160], sizes = [8, 16], strides = [1, 1]} : vector<16x192xbf16> to vector<8x16xbf16>
      %cst_56 = arith.constant dense<0.000000e+00> : vector<8x8xf32>
      %142 = tpu.matmul %139, %140, %cst_56 {dimension_numbers = #tpu.dot_dimension_numbers<[1], [1], [0], [0], [0, 0, 1, 0], [], []>} : vector<8x16xbf16>, vector<8x16xbf16>, vector<8x8xf32> -> vector<8x8xf32>
      %143 = arith.addf %142, %104 : vector<8x8xf32>
      %cst_57 = arith.constant dense<0xFF800000> : vector<8xf32>
      %144 = vector.multi_reduction <maximumf>, %143, %cst_57 [1] : vector<8x8xf32> to vector<8xf32>
      %145 = vector.shape_cast %144 : vector<8xf32> to vector<8x1xf32>
      %146 = vector.broadcast %145 : vector<8x1xf32> to vector<8x8xf32>
      %147 = arith.subf %143, %146 : vector<8x8xf32>
      %148 = math.exp %147 : vector<8x8xf32>
      %cst_58 = arith.constant dense<0.000000e+00> : vector<8xf32>
      %149 = vector.multi_reduction <add>, %148, %cst_58 [1] : vector<8x8xf32> to vector<8xf32>
      %150 = vector.shape_cast %149 : vector<8xf32> to vector<8x1xf32>
      %151 = tpu.reciprocal %150 {approx = true} : vector<8x1xf32> -> vector<8x1xf32>
      %152 = vector.broadcast %151 : vector<8x1xf32> to vector<8x8xf32>
      %153 = arith.mulf %148, %152 : vector<8x8xf32>
      %154 = arith.truncf %153 : vector<8x8xf32> to vector<8x8xbf16>
      %cst_59 = arith.constant dense<0.000000e+00> : vector<8x16xf32>
      %155 = tpu.matmul %154, %141, %cst_59 {dimension_numbers = #tpu.dot_dimension_numbers<[1], [0], [0], [1], [0, 0, 1, 1], [], []>} : vector<8x8xbf16>, vector<8x16xbf16>, vector<8x16xf32> -> vector<8x16xf32>
      %156 = vector.extract_strided_slice %98 {offsets = [0, 48], sizes = [8, 16], strides = [1, 1]} : vector<16x192xbf16> to vector<8x16xbf16>
      %157 = vector.extract_strided_slice %98 {offsets = [0, 112], sizes = [8, 16], strides = [1, 1]} : vector<16x192xbf16> to vector<8x16xbf16>
      %158 = vector.extract_strided_slice %98 {offsets = [0, 176], sizes = [8, 16], strides = [1, 1]} : vector<16x192xbf16> to vector<8x16xbf16>
      %cst_60 = arith.constant dense<0.000000e+00> : vector<8x8xf32>
      %159 = tpu.matmul %156, %157, %cst_60 {dimension_numbers = #tpu.dot_dimension_numbers<[1], [1], [0], [0], [0, 0, 1, 0], [], []>} : vector<8x16xbf16>, vector<8x16xbf16>, vector<8x8xf32> -> vector<8x8xf32>
      %160 = arith.addf %159, %104 : vector<8x8xf32>
      %cst_61 = arith.constant dense<0xFF800000> : vector<8xf32>
      %161 = vector.multi_reduction <maximumf>, %160, %cst_61 [1] : vector<8x8xf32> to vector<8xf32>
      %162 = vector.shape_cast %161 : vector<8xf32> to vector<8x1xf32>
      %163 = vector.broadcast %162 : vector<8x1xf32> to vector<8x8xf32>
      %164 = arith.subf %160, %163 : vector<8x8xf32>
      %165 = math.exp %164 : vector<8x8xf32>
      %cst_62 = arith.constant dense<0.000000e+00> : vector<8xf32>
      %166 = vector.multi_reduction <add>, %165, %cst_62 [1] : vector<8x8xf32> to vector<8xf32>
      %167 = vector.shape_cast %166 : vector<8xf32> to vector<8x1xf32>
      %168 = tpu.reciprocal %167 {approx = true} : vector<8x1xf32> -> vector<8x1xf32>
      %169 = vector.broadcast %168 : vector<8x1xf32> to vector<8x8xf32>
      %170 = arith.mulf %165, %169 : vector<8x8xf32>
      %171 = arith.truncf %170 : vector<8x8xf32> to vector<8x8xbf16>
      %cst_63 = arith.constant dense<0.000000e+00> : vector<8x16xf32>
      %172 = tpu.matmul %171, %158, %cst_63 {dimension_numbers = #tpu.dot_dimension_numbers<[1], [0], [0], [1], [0, 0, 1, 1], [], []>} : vector<8x8xbf16>, vector<8x16xbf16>, vector<8x16xf32> -> vector<8x16xf32>
      %173 = tpu.concatenate %121, %138, %155, %172 in 1 : vector<8x16xf32>, vector<8x16xf32>, vector<8x16xf32>, vector<8x16xf32> -> vector<8x64xf32>
      %174 = vector.extract_strided_slice %61 {offsets = [0, 0], sizes = [8, 64], strides = [1, 1]} : vector<16x64xf32> to vector<8x64xf32>
      %175 = arith.addf %174, %173 : vector<8x64xf32>
      %176 = vector.extract_strided_slice %98 {offsets = [8, 0], sizes = [8, 16], strides = [1, 1]} : vector<16x192xbf16> to vector<8x16xbf16>
      %177 = vector.extract_strided_slice %98 {offsets = [8, 64], sizes = [8, 16], strides = [1, 1]} : vector<16x192xbf16> to vector<8x16xbf16>
      %178 = vector.extract_strided_slice %98 {offsets = [8, 128], sizes = [8, 16], strides = [1, 1]} : vector<16x192xbf16> to vector<8x16xbf16>
      %cst_64 = arith.constant dense<0.000000e+00> : vector<8x8xf32>
      %179 = tpu.matmul %176, %177, %cst_64 {dimension_numbers = #tpu.dot_dimension_numbers<[1], [1], [0], [0], [0, 0, 1, 0], [], []>} : vector<8x16xbf16>, vector<8x16xbf16>, vector<8x8xf32> -> vector<8x8xf32>
      %180 = arith.addf %179, %104 : vector<8x8xf32>
      %cst_65 = arith.constant dense<0xFF800000> : vector<8xf32>
      %181 = vector.multi_reduction <maximumf>, %180, %cst_65 [1] : vector<8x8xf32> to vector<8xf32>
      %182 = vector.shape_cast %181 : vector<8xf32> to vector<8x1xf32>
      %183 = vector.broadcast %182 : vector<8x1xf32> to vector<8x8xf32>
      %184 = arith.subf %180, %183 : vector<8x8xf32>
      %185 = math.exp %184 : vector<8x8xf32>
      %cst_66 = arith.constant dense<0.000000e+00> : vector<8xf32>
      %186 = vector.multi_reduction <add>, %185, %cst_66 [1] : vector<8x8xf32> to vector<8xf32>
      %187 = vector.shape_cast %186 : vector<8xf32> to vector<8x1xf32>
      %188 = tpu.reciprocal %187 {approx = true} : vector<8x1xf32> -> vector<8x1xf32>
      %189 = vector.broadcast %188 : vector<8x1xf32> to vector<8x8xf32>
      %190 = arith.mulf %185, %189 : vector<8x8xf32>
      %191 = arith.truncf %190 : vector<8x8xf32> to vector<8x8xbf16>
      %cst_67 = arith.constant dense<0.000000e+00> : vector<8x16xf32>
      %192 = tpu.matmul %191, %178, %cst_67 {dimension_numbers = #tpu.dot_dimension_numbers<[1], [0], [0], [1], [0, 0, 1, 1], [], []>} : vector<8x8xbf16>, vector<8x16xbf16>, vector<8x16xf32> -> vector<8x16xf32>
      %193 = vector.extract_strided_slice %98 {offsets = [8, 16], sizes = [8, 16], strides = [1, 1]} : vector<16x192xbf16> to vector<8x16xbf16>
      %194 = vector.extract_strided_slice %98 {offsets = [8, 80], sizes = [8, 16], strides = [1, 1]} : vector<16x192xbf16> to vector<8x16xbf16>
      %195 = vector.extract_strided_slice %98 {offsets = [8, 144], sizes = [8, 16], strides = [1, 1]} : vector<16x192xbf16> to vector<8x16xbf16>
      %cst_68 = arith.constant dense<0.000000e+00> : vector<8x8xf32>
      %196 = tpu.matmul %193, %194, %cst_68 {dimension_numbers = #tpu.dot_dimension_numbers<[1], [1], [0], [0], [0, 0, 1, 0], [], []>} : vector<8x16xbf16>, vector<8x16xbf16>, vector<8x8xf32> -> vector<8x8xf32>
      %197 = arith.addf %196, %104 : vector<8x8xf32>
      %cst_69 = arith.constant dense<0xFF800000> : vector<8xf32>
      %198 = vector.multi_reduction <maximumf>, %197, %cst_69 [1] : vector<8x8xf32> to vector<8xf32>
      %199 = vector.shape_cast %198 : vector<8xf32> to vector<8x1xf32>
      %200 = vector.broadcast %199 : vector<8x1xf32> to vector<8x8xf32>
      %201 = arith.subf %197, %200 : vector<8x8xf32>
      %202 = math.exp %201 : vector<8x8xf32>
      %cst_70 = arith.constant dense<0.000000e+00> : vector<8xf32>
      %203 = vector.multi_reduction <add>, %202, %cst_70 [1] : vector<8x8xf32> to vector<8xf32>
      %204 = vector.shape_cast %203 : vector<8xf32> to vector<8x1xf32>
      %205 = tpu.reciprocal %204 {approx = true} : vector<8x1xf32> -> vector<8x1xf32>
      %206 = vector.broadcast %205 : vector<8x1xf32> to vector<8x8xf32>
      %207 = arith.mulf %202, %206 : vector<8x8xf32>
      %208 = arith.truncf %207 : vector<8x8xf32> to vector<8x8xbf16>
      %cst_71 = arith.constant dense<0.000000e+00> : vector<8x16xf32>
      %209 = tpu.matmul %208, %195, %cst_71 {dimension_numbers = #tpu.dot_dimension_numbers<[1], [0], [0], [1], [0, 0, 1, 1], [], []>} : vector<8x8xbf16>, vector<8x16xbf16>, vector<8x16xf32> -> vector<8x16xf32>
      %210 = vector.extract_strided_slice %98 {offsets = [8, 32], sizes = [8, 16], strides = [1, 1]} : vector<16x192xbf16> to vector<8x16xbf16>
      %211 = vector.extract_strided_slice %98 {offsets = [8, 96], sizes = [8, 16], strides = [1, 1]} : vector<16x192xbf16> to vector<8x16xbf16>
      %212 = vector.extract_strided_slice %98 {offsets = [8, 160], sizes = [8, 16], strides = [1, 1]} : vector<16x192xbf16> to vector<8x16xbf16>
      %cst_72 = arith.constant dense<0.000000e+00> : vector<8x8xf32>
      %213 = tpu.matmul %210, %211, %cst_72 {dimension_numbers = #tpu.dot_dimension_numbers<[1], [1], [0], [0], [0, 0, 1, 0], [], []>} : vector<8x16xbf16>, vector<8x16xbf16>, vector<8x8xf32> -> vector<8x8xf32>
      %214 = arith.addf %213, %104 : vector<8x8xf32>
      %cst_73 = arith.constant dense<0xFF800000> : vector<8xf32>
      %215 = vector.multi_reduction <maximumf>, %214, %cst_73 [1] : vector<8x8xf32> to vector<8xf32>
      %216 = vector.shape_cast %215 : vector<8xf32> to vector<8x1xf32>
      %217 = vector.broadcast %216 : vector<8x1xf32> to vector<8x8xf32>
      %218 = arith.subf %214, %217 : vector<8x8xf32>
      %219 = math.exp %218 : vector<8x8xf32>
      %cst_74 = arith.constant dense<0.000000e+00> : vector<8xf32>
      %220 = vector.multi_reduction <add>, %219, %cst_74 [1] : vector<8x8xf32> to vector<8xf32>
      %221 = vector.shape_cast %220 : vector<8xf32> to vector<8x1xf32>
      %222 = tpu.reciprocal %221 {approx = true} : vector<8x1xf32> -> vector<8x1xf32>
      %223 = vector.broadcast %222 : vector<8x1xf32> to vector<8x8xf32>
      %224 = arith.mulf %219, %223 : vector<8x8xf32>
      %225 = arith.truncf %224 : vector<8x8xf32> to vector<8x8xbf16>
      %cst_75 = arith.constant dense<0.000000e+00> : vector<8x16xf32>
      %226 = tpu.matmul %225, %212, %cst_75 {dimension_numbers = #tpu.dot_dimension_numbers<[1], [0], [0], [1], [0, 0, 1, 1], [], []>} : vector<8x8xbf16>, vector<8x16xbf16>, vector<8x16xf32> -> vector<8x16xf32>
      %227 = vector.extract_strided_slice %98 {offsets = [8, 48], sizes = [8, 16], strides = [1, 1]} : vector<16x192xbf16> to vector<8x16xbf16>
      %228 = vector.extract_strided_slice %98 {offsets = [8, 112], sizes = [8, 16], strides = [1, 1]} : vector<16x192xbf16> to vector<8x16xbf16>
      %229 = vector.extract_strided_slice %98 {offsets = [8, 176], sizes = [8, 16], strides = [1, 1]} : vector<16x192xbf16> to vector<8x16xbf16>
      %cst_76 = arith.constant dense<0.000000e+00> : vector<8x8xf32>
      %230 = tpu.matmul %227, %228, %cst_76 {dimension_numbers = #tpu.dot_dimension_numbers<[1], [1], [0], [0], [0, 0, 1, 0], [], []>} : vector<8x16xbf16>, vector<8x16xbf16>, vector<8x8xf32> -> vector<8x8xf32>
      %231 = arith.addf %230, %104 : vector<8x8xf32>
      %cst_77 = arith.constant dense<0xFF800000> : vector<8xf32>
      %232 = vector.multi_reduction <maximumf>, %231, %cst_77 [1] : vector<8x8xf32> to vector<8xf32>
      %233 = vector.shape_cast %232 : vector<8xf32> to vector<8x1xf32>
      %234 = vector.broadcast %233 : vector<8x1xf32> to vector<8x8xf32>
      %235 = arith.subf %231, %234 : vector<8x8xf32>
      %236 = math.exp %235 : vector<8x8xf32>
      %cst_78 = arith.constant dense<0.000000e+00> : vector<8xf32>
      %237 = vector.multi_reduction <add>, %236, %cst_78 [1] : vector<8x8xf32> to vector<8xf32>
      %238 = vector.shape_cast %237 : vector<8xf32> to vector<8x1xf32>
      %239 = tpu.reciprocal %238 {approx = true} : vector<8x1xf32> -> vector<8x1xf32>
      %240 = vector.broadcast %239 : vector<8x1xf32> to vector<8x8xf32>
      %241 = arith.mulf %236, %240 : vector<8x8xf32>
      %242 = arith.truncf %241 : vector<8x8xf32> to vector<8x8xbf16>
      %cst_79 = arith.constant dense<0.000000e+00> : vector<8x16xf32>
      %243 = tpu.matmul %242, %229, %cst_79 {dimension_numbers = #tpu.dot_dimension_numbers<[1], [0], [0], [1], [0, 0, 1, 1], [], []>} : vector<8x8xbf16>, vector<8x16xbf16>, vector<8x16xf32> -> vector<8x16xf32>
      %244 = tpu.concatenate %192, %209, %226, %243 in 1 : vector<8x16xf32>, vector<8x16xf32>, vector<8x16xf32>, vector<8x16xf32> -> vector<8x64xf32>
      %245 = vector.extract_strided_slice %61 {offsets = [8, 0], sizes = [8, 64], strides = [1, 1]} : vector<16x64xf32> to vector<8x64xf32>
      %246 = arith.addf %245, %244 : vector<8x64xf32>
      %247 = tpu.concatenate %175, %246 in 0 : vector<8x64xf32>, vector<8x64xf32> -> vector<16x64xf32>
      %c0_80 = arith.constant 0 : index
      %c0_81 = arith.constant 0 : index
      %248 = vector.load %arg7[%c0_80, %c0_81] : memref<1x64xf32, #tpu.memory_space<vmem>>, vector<1x64xf32>
      %249 = vector.shape_cast %248 : vector<1x64xf32> to vector<64xf32>
      %c0_82 = arith.constant 0 : index
      %c0_83 = arith.constant 0 : index
      %250 = vector.load %arg8[%c0_82, %c0_83] : memref<1x64xf32, #tpu.memory_space<vmem>>, vector<1x64xf32>
      %251 = vector.shape_cast %250 : vector<1x64xf32> to vector<64xf32>
      %cst_84 = arith.constant dense<0.000000e+00> : vector<16xf32>
      %252 = vector.multi_reduction <add>, %247, %cst_84 [1] : vector<16x64xf32> to vector<16xf32>
      %253 = vector.shape_cast %252 : vector<16xf32> to vector<16x1xf32>
      %cst_85 = arith.constant 6.400000e+01 : f32
      %254 = vector.broadcast %cst_85 : f32 to vector<16x1xf32>
      %255 = arith.divf %253, %254 : vector<16x1xf32>
      %256 = vector.broadcast %255 : vector<16x1xf32> to vector<16x64xf32>
      %257 = arith.subf %247, %256 : vector<16x64xf32>
      %258 = arith.mulf %257, %257 : vector<16x64xf32>
      %cst_86 = arith.constant dense<0.000000e+00> : vector<16xf32>
      %259 = vector.multi_reduction <add>, %258, %cst_86 [1] : vector<16x64xf32> to vector<16xf32>
      %260 = vector.shape_cast %259 : vector<16xf32> to vector<16x1xf32>
      %cst_87 = arith.constant 6.400000e+01 : f32
      %261 = vector.broadcast %cst_87 : f32 to vector<16x1xf32>
      %262 = arith.divf %260, %261 : vector<16x1xf32>
      %263 = vector.broadcast %255 : vector<16x1xf32> to vector<16x64xf32>
      %264 = arith.subf %247, %263 : vector<16x64xf32>
      %cst_88 = arith.constant 9.99999974E-6 : f32
      %265 = vector.broadcast %cst_88 : f32 to vector<16x1xf32>
      %266 = arith.addf %262, %265 : vector<16x1xf32>
      %267 = math.rsqrt %266 : vector<16x1xf32>
      %268 = vector.broadcast %267 : vector<16x1xf32> to vector<16x64xf32>
      %269 = arith.mulf %264, %268 : vector<16x64xf32>
      %270 = vector.shape_cast %249 : vector<64xf32> to vector<1x64xf32>
      %271 = vector.broadcast %270 : vector<1x64xf32> to vector<16x64xf32>
      %272 = arith.mulf %269, %271 : vector<16x64xf32>
      %273 = vector.shape_cast %251 : vector<64xf32> to vector<1x64xf32>
      %274 = vector.broadcast %273 : vector<1x64xf32> to vector<16x64xf32>
      %275 = arith.addf %272, %274 : vector<16x64xf32>
      %276 = arith.truncf %275 : vector<16x64xf32> to vector<16x64xbf16>
      %c0_89 = arith.constant 0 : index
      %c0_90 = arith.constant 0 : index
      %277 = vector.load %arg14[%c0_89, %c0_90] : memref<16x64xbf16, #tpu.memory_space<vmem>>, vector<16x64xbf16>
      tpu.vector_store %arg14[%c0_89, %c0_90], %276 {strides = array<i32>} : memref<16x64xbf16, #tpu.memory_space<vmem>>, vector<16x64xbf16>,
      %c0_91 = arith.constant 0 : index
      %c0_92 = arith.constant 0 : index
      %278 = vector.load %arg12[%c0_91, %c0_92] : memref<1x64xf32, #tpu.memory_space<vmem>>, vector<1x64xf32>
      %279 = vector.shape_cast %278 : vector<1x64xf32> to vector<64xf32>
      %280 = vector.shape_cast %279 : vector<64xf32> to vector<1x64xf32>
      %281 = vector.broadcast %280 : vector<1x64xf32> to vector<16x64xf32>
      %282 = arith.addf %247, %281 : vector<16x64xf32>
      %c0_93 = arith.constant 0 : index
      %c0_94 = arith.constant 0 : index
      %283 = vector.load %arg15[%c0_93, %c0_94] : memref<16x64xf32, #tpu.memory_space<vmem>>, vector<16x64xf32>
      tpu.vector_store %arg15[%c0_93, %c0_94], %282 {strides = array<i32>} : memref<16x64xf32, #tpu.memory_space<vmem>>, vector<16x64xf32>,
    } else {
    }
    %c0 = arith.constant 0 : index
    %c0_1 = arith.constant 0 : index
    %3 = vector.load %arg14[%c0, %c0_1] : memref<16x64xbf16, #tpu.memory_space<vmem>>, vector<16x64xbf16>
    %c0_2 = arith.constant 0 : index
    %c0_3 = arith.constant 0 : index
    %4 = vector.load %arg9[%c0_2, %c0_3] : memref<64x128xbf16, #tpu.memory_space<vmem>>, vector<64x128xbf16>
    %cst = arith.constant dense<0.000000e+00> : vector<16x128xf32>
    %5 = tpu.matmul %3, %4, %cst {dimension_numbers = #tpu.dot_dimension_numbers<[1], [0], [0], [1], [0, 0, 1, 1], [], []>} : vector<16x64xbf16>, vector<64x128xbf16>, vector<16x128xf32> -> vector<16x128xf32>
    %c0_4 = arith.constant 0 : index
    %c0_5 = arith.constant 0 : index
    %6 = vector.load %arg10[%c0_4, %c0_5] : memref<1x128xf32, #tpu.memory_space<vmem>>, vector<1x128xf32>
    %7 = vector.shape_cast %6 : vector<1x128xf32> to vector<128xf32>
    %8 = vector.shape_cast %7 : vector<128xf32> to vector<1x128xf32>
    %9 = vector.broadcast %8 : vector<1x128xf32> to vector<16x128xf32>
    %10 = arith.addf %5, %9 : vector<16x128xf32>
    %cst_6 = arith.constant 5.000000e-01 : f32
    %11 = vector.broadcast %cst_6 : f32 to vector<16x128xf32>
    %12 = arith.mulf %11, %10 : vector<16x128xf32>
    %cst_7 = arith.constant 0.707106769 : f32
    %13 = vector.broadcast %cst_7 : f32 to vector<16x128xf32>
    %14 = arith.mulf %10, %13 : vector<16x128xf32>
    %cst_8 = arith.constant 0.000000e+00 : f32
    %15 = vector.broadcast %cst_8 : f32 to vector<16x128xf32>
    %16 = arith.cmpf oge, %14, %15 : vector<16x128xf32>
    %cst_9 = arith.constant 1.000000e+00 : f32
    %cst_10 = arith.constant -1.000000e+00 : f32
    %17 = vector.broadcast %cst_9 : f32 to vector<16x128xf32>
    %18 = vector.broadcast %cst_10 : f32 to vector<16x128xf32>
    %19 = arith.select %16, %17, %18 : vector<16x128xi1>, vector<16x128xf32>
    %20 = math.absf %14 : vector<16x128xf32>
    %cst_11 = arith.constant 0.327591091 : f32
    %21 = vector.broadcast %cst_11 : f32 to vector<16x128xf32>
    %22 = arith.mulf %21, %20 : vector<16x128xf32>
    %cst_12 = arith.constant 1.000000e+00 : f32
    %23 = vector.broadcast %cst_12 : f32 to vector<16x128xf32>
    %24 = arith.addf %23, %22 : vector<16x128xf32>
    %cst_13 = arith.constant 1.000000e+00 : f32
    %25 = vector.broadcast %cst_13 : f32 to vector<16x128xf32>
    %26 = arith.divf %25, %24 : vector<16x128xf32>
    %cst_14 = arith.constant 1.06140542 : f32
    %27 = vector.broadcast %cst_14 : f32 to vector<16x128xf32>
    %28 = arith.mulf %27, %26 : vector<16x128xf32>
    %cst_15 = arith.constant -1.45315206 : f32
    %29 = vector.broadcast %cst_15 : f32 to vector<16x128xf32>
    %30 = arith.addf %28, %29 : vector<16x128xf32>
    %31 = arith.mulf %30, %26 : vector<16x128xf32>
    %cst_16 = arith.constant 1.42141378 : f32
    %32 = vector.broadcast %cst_16 : f32 to vector<16x128xf32>
    %33 = arith.addf %31, %32 : vector<16x128xf32>
    %34 = arith.mulf %33, %26 : vector<16x128xf32>
    %cst_17 = arith.constant -0.284496725 : f32
    %35 = vector.broadcast %cst_17 : f32 to vector<16x128xf32>
    %36 = arith.addf %34, %35 : vector<16x128xf32>
    %37 = arith.mulf %36, %26 : vector<16x128xf32>
    %cst_18 = arith.constant 0.254829586 : f32
    %38 = vector.broadcast %cst_18 : f32 to vector<16x128xf32>
    %39 = arith.addf %37, %38 : vector<16x128xf32>
    %40 = arith.mulf %39, %26 : vector<16x128xf32>
    %cst_19 = arith.constant 0.000000e+00 : f32
    %41 = vector.broadcast %cst_19 : f32 to vector<16x128xf32>
    %42 = arith.subf %41, %20 : vector<16x128xf32>
    %43 = arith.mulf %42, %20 : vector<16x128xf32>
    %44 = math.exp %43 : vector<16x128xf32>
    %45 = arith.mulf %40, %44 : vector<16x128xf32>
    %cst_20 = arith.constant 1.000000e+00 : f32
    %46 = vector.broadcast %cst_20 : f32 to vector<16x128xf32>
    %47 = arith.subf %46, %45 : vector<16x128xf32>
    %48 = arith.mulf %19, %47 : vector<16x128xf32>
    %cst_21 = arith.constant 1.000000e+00 : f32
    %49 = vector.broadcast %cst_21 : f32 to vector<16x128xf32>
    %50 = arith.addf %49, %48 : vector<16x128xf32>
    %51 = arith.mulf %12, %50 : vector<16x128xf32>
    %c0_22 = arith.constant 0 : index
    %c0_23 = arith.constant 0 : index
    %52 = vector.load %arg15[%c0_22, %c0_23] : memref<16x64xf32, #tpu.memory_space<vmem>>, vector<16x64xf32>
    %53 = arith.truncf %51 : vector<16x128xf32> to vector<16x128xbf16>
    %c0_24 = arith.constant 0 : index
    %c0_25 = arith.constant 0 : index
    %54 = vector.load %arg11[%c0_24, %c0_25] : memref<128x64xbf16, #tpu.memory_space<vmem>>, vector<128x64xbf16>
    %cst_26 = arith.constant dense<0.000000e+00> : vector<16x64xf32>
    %55 = tpu.matmul %53, %54, %cst_26 {dimension_numbers = #tpu.dot_dimension_numbers<[1], [0], [0], [1], [0, 0, 1, 1], [], []>} : vector<16x128xbf16>, vector<128x64xbf16>, vector<16x64xf32> -> vector<16x64xf32>
    %56 = arith.addf %52, %55 : vector<16x64xf32>
    %c0_27 = arith.constant 0 : index
    %c0_28 = arith.constant 0 : index
    %57 = vector.load %arg15[%c0_27, %c0_28] : memref<16x64xf32, #tpu.memory_space<vmem>>, vector<16x64xf32>
    tpu.vector_store %arg15[%c0_27, %c0_28], %56 {strides = array<i32>} : memref<16x64xf32, #tpu.memory_space<vmem>>, vector<16x64xf32>,
    %c1_i32 = arith.constant 1 : i32
    %58 = arith.cmpi eq, %arg1, %c1_i32 : i32
    %59 = arith.extui %58 : i1 to i32
    %c0_i32_29 = arith.constant 0 : i32
    %60 = arith.cmpi ne, %59, %c0_i32_29 : i32
    scf.if %60 {
      %c0_30 = arith.constant 0 : index
      %c0_31 = arith.constant 0 : index
      %61 = vector.load %arg15[%c0_30, %c0_31] : memref<16x64xf32, #tpu.memory_space<vmem>>, vector<16x64xf32>
      %c0_32 = arith.constant 0 : index
      %c0_33 = arith.constant 0 : index
      %62 = vector.load %arg13[%c0_32, %c0_33] : memref<16x64xf32, #tpu.memory_space<vmem>>, vector<16x64xf32>
      tpu.vector_store %arg13[%c0_32, %c0_33], %61 {strides = array<i32>} : memref<16x64xf32, #tpu.memory_space<vmem>>, vector<16x64xf32>,
    } else {
    }
    return
  }
  func.func @transform_0(%arg0: i32, %arg1: i32) -> (i32, i32) {
    %c0_i32 = arith.constant 0 : i32
    %c0_i32_0 = arith.constant 0 : i32
    return %arg0, %c0_i32 : i32, i32
  }
  func.func @transform_1(%arg0: i32, %arg1: i32) -> (i32, i32) {
    %c0_i32 = arith.constant 0 : i32
    %c0_i32_0 = arith.constant 0 : i32
    %c0_i32_1 = arith.constant 0 : i32
    return %c0_i32, %c0_i32_0 : i32, i32
  }
  func.func @transform_2(%arg0: i32, %arg1: i32) -> (i32, i32) {
    %c0_i32 = arith.constant 0 : i32
    %c0_i32_0 = arith.constant 0 : i32
    %c0_i32_1 = arith.constant 0 : i32
    return %c0_i32, %c0_i32_0 : i32, i32
  }
  func.func @transform_3(%arg0: i32, %arg1: i32) -> (i32, i32) {
    %c0_i32 = arith.constant 0 : i32
    %c0_i32_0 = arith.constant 0 : i32
    %c0_i32_1 = arith.constant 0 : i32
    return %c0_i32, %c0_i32_0 : i32, i32
  }
  func.func @transform_4(%arg0: i32, %arg1: i32) -> (i32, i32) {
    %c0_i32 = arith.constant 0 : i32
    %c0_i32_0 = arith.constant 0 : i32
    %c0_i32_1 = arith.constant 0 : i32
    return %c0_i32, %c0_i32_0 : i32, i32
  }
  func.func @transform_5(%arg0: i32, %arg1: i32) -> (i32, i32) {
    %c0_i32 = arith.constant 0 : i32
    %c0_i32_0 = arith.constant 0 : i32
    %c0_i32_1 = arith.constant 0 : i32
    return %c0_i32, %c0_i32_0 : i32, i32
  }
  func.func @transform_6(%arg0: i32, %arg1: i32) -> (i32, i32) {
    %c0_i32 = arith.constant 0 : i32
    %c0_i32_0 = arith.constant 0 : i32
    %c0_i32_1 = arith.constant 0 : i32
    return %c0_i32, %c0_i32_0 : i32, i32
  }
  func.func @transform_7(%arg0: i32, %arg1: i32) -> (i32, i32) {
    %c0_i32 = arith.constant 0 : i32
    %c0_i32_0 = arith.constant 0 : i32
    return %c0_i32, %arg1 : i32, i32
  }
  func.func @transform_8(%arg0: i32, %arg1: i32) -> (i32, i32) {
    %c0_i32 = arith.constant 0 : i32
    %c0_i32_0 = arith.constant 0 : i32
    return %c0_i32, %arg1 : i32, i32
  }
  func.func @transform_9(%arg0: i32, %arg1: i32) -> (i32, i32) {
    %c0_i32 = arith.constant 0 : i32
    %c0_i32_0 = arith.constant 0 : i32
    return %arg1, %c0_i32 : i32, i32
  }
  func.func @transform_10(%arg0: i32, %arg1: i32) -> (i32, i32) {
    %c0_i32 = arith.constant 0 : i32
    %c0_i32_0 = arith.constant 0 : i32
    %c0_i32_1 = arith.constant 0 : i32
    return %c0_i32, %c0_i32_0 : i32, i32
  }
  func.func @transform_11(%arg0: i32, %arg1: i32) -> (i32, i32) {
    %c0_i32 = arith.constant 0 : i32
    %c0_i32_0 = arith.constant 0 : i32
    return %arg0, %c0_i32 : i32, i32
  }
}

</mosaic_0001>

<llo_original>
// kernel: tpu_custom_call.1
$region0: #{tpu_custom_call.1}
  #allocation0 [shape = 'u32[]', space=smem, size = 0x4, offset = 0x4, fixed_abs, tag = 'smem constant byte address 0x4 - core index']
  #allocation1 [shape = 'u32[144,128]{1,0:T(1,128)}', space=vmem, size = 0x12000, scoped, tag = 'internal scratch']
  #allocation2 [shape = 'bf16[16,64]{1,0:T(16,128)(2,1)}', space=vmem, size = 0x1000, scoped, tag = 'scratch operand']
  #allocation3 [shape = 'f32[16,64]{1,0:T(8,128)}', space=vmem, size = 0x2000, scoped, tag = 'scratch operand']
  %s0 = inlined_call_operand.vmem [shape: f32[16,64], index: 0, kind: input, shape index: {}]
  %s1 = inlined_call_operand.vmem [shape: f32[1,64], index: 1, kind: input, shape index: {}]
  %s2 = inlined_call_operand.vmem [shape: f32[1,64], index: 2, kind: input, shape index: {}]
  %s3 = inlined_call_operand.vmem [shape: bf16[64,192], index: 3, kind: input, shape index: {}]
  %s4 = inlined_call_operand.vmem [shape: f32[1,192], index: 4, kind: input, shape index: {}]
  %s5 = inlined_call_operand.vmem [shape: f32[1,64], index: 5, kind: input, shape index: {}]
  %s6 = inlined_call_operand.vmem [shape: f32[1,64], index: 6, kind: input, shape index: {}]
  %s7 = inlined_call_operand.vmem [shape: bf16[64,256], index: 7, kind: input, shape index: {}]
  %s8 = inlined_call_operand.vmem [shape: f32[1,256], index: 8, kind: input, shape index: {}]
  %s9 = inlined_call_operand.vmem [shape: bf16[256,64], index: 9, kind: input, shape index: {}]
  %s10 = inlined_call_operand.vmem [shape: f32[1,64], index: 10, kind: input, shape index: {}]
  %s11 = inlined_call_operand.hbm [shape: f32[16,64], index: 11, kind: output, shape index: {}]
  %s12 = sld [smem:[#allocation0]]
  $region126: #{tpu_custom_call.1} parent=0
    _
  %s14 = ssub.s32 1, %s12
  %s15 = scalar_select 0, %s14, %s12
  $region1: #{tpu_custom_call.1} parent=0
    #allocation4 [shape = 'u8[32768]{0}', space=vmem, size = 0x8000, scoped, tag = 'input window, operand 7']
    #allocation5 [shape = 'u8[8192]{0}', space=vmem, size = 0x2000, scoped, tag = 'output window, operand 0, single buffered']
    #allocation6 [shape = 's32[2]{0}', space=sflag, size = 0x8, scoped, tag = 'scoped memory for tpu_custom_call.1']
    %16 = vsyncpa [#allocation6], 0
    loop: start=0, step=1, limit=4
    $region2: #{tpu_custom_call.1} parent=1 // loop_pre_header
      _
    $region3: #{tpu_custom_call.1} parent=1 // loop_header
      %s18 = sphi 0, %s22
      %p19 = scmp.ge.s32.totalorder %s18, 4
      %s25 = sphi 0, %s37
      %s26 = sphi 0, %s33
      %s27 = sphi 0, %s25
      %s28 = sphi 0, %s26
      %s29 = sphi 0, %s27
      %s30 = sphi 0, %s28
      %s40 = sphi 0, %s42
      %s43 = sphi 0, %s40
      %s44 = sphi 0, %s43
      %s60 = sphi 0, %s44
      %s64 = sphi 0, %s64
      %s66 = sphi 0, %s64
      %s67 = sphi 0, %s66
      %s81 = sphi 0, %s67
      %s85 = sphi 0, %s85
      %s87 = sphi 0, %s85
      %s88 = sphi 0, %s87
      %s102 = sphi 0, %s88
      %s106 = sphi 0, %s106
      %s108 = sphi 0, %s106
      %s109 = sphi 0, %s108
      %s123 = sphi 0, %s109
      %s127 = sphi 0, %s127
      %s129 = sphi 0, %s127
      %s130 = sphi 0, %s129
      %s144 = sphi 0, %s130
      %s148 = sphi 0, %s148
      %s150 = sphi 0, %s148
      %s151 = sphi 0, %s150
      %s165 = sphi 0, %s151
      %s169 = sphi 0, %s169
      %s171 = sphi 0, %s169
      %s172 = sphi 0, %s171
      %s186 = sphi 0, %s172
      %s192 = sphi 0, %s194
      %s195 = sphi 0, %s192
      %s196 = sphi 0, %s195
      %s212 = sphi 0, %s196
      %s218 = sphi 0, %s220
      %s221 = sphi 0, %s218
      %s222 = sphi 0, %s221
      %s238 = sphi 0, %s222
      %s244 = sphi 0, %s246
      %s247 = sphi 0, %s244
      %s248 = sphi 0, %s247
      %s264 = sphi 0, %s248
      %s268 = sphi 0, %s268
      %s270 = sphi 0, %s268
      %s271 = sphi 0, %s270
      %s285 = sphi 0, %s271
      %s291 = sphi 0, %s293
      %s294 = sphi 0, %s291
      %s295 = sphi 0, %s294
      %s311 = sphi 0, %s295
    $region4: #{tpu_custom_call.1} parent=1 // loop_header_branch
      %21 = sbr.rel (%p19) target = $region8
    $region5: #{tpu_custom_call.1} parent=1 // loop_body
      %s23 = ssub.s32 %s18, 1
      %s24 = ssub.s32 %s18, 2
      %s31 = sadd.s32 1, %s26
      %p32 = scmp.ge.s32.totalorder %s31, 2
      %s33 = scalar_select %p32, 0, %s31
      %s34 = sadd.s32 1, %s25
      %s35 = scalar_select %p32, %s34, %s25
      %p36 = scmp.ge.s32.totalorder %s35, 1
      %s37 = scalar_select %p36, 0, %s35
      %s38 = ssub.s32 %s25, %s37
      %p39 = scmp.eq.s32.totalorder %s38, 0
      %s41 = sadd.s32 %s40, 1
      %s42 = scalar_select %p39, %s40, %s41
      %p45 = pneg %p39
      %p46 = scmp.eq.s32.totalorder %s18, 1
      %p47 = por %p45, %p46
      %p48 = scmp.ne.s32.totalorder %s40, %s43
      %p49 = scmp.eq.s32.totalorder %s18, 0
      %p50 = por %p48, %p49
      %p51 = scmp.ne.s32.totalorder %s40, %s43
      %p52 = scmp.eq.s32.totalorder %s23, 1
      %p53 = por %p51, %p52
      %p54 = scmp.ne.s32.totalorder %s43, %s44
      %p55 = scmp.eq.s32.totalorder %s23, 0
      %p56 = por %p54, %p55
      %p57 = scmp.ne.s32.totalorder %s43, %s44
      %p58 = scmp.eq.s32.totalorder %s24, 1
      %p59 = por %p57, %p58
      %p61 = scmp.ne.s32.totalorder %s44, %s60
      %p62 = scmp.eq.s32.totalorder %s24, 0
      %p63 = por %p61, %p62
      %s65 = sadd.s32 %s64, 1
      %p68 = scmp.eq.s32.totalorder %s18, 1
      %p69 = scmp.ne.s32.totalorder %s64, %s66
      %p70 = scmp.eq.s32.totalorder %s18, 0
      %p71 = por %p69, %p70
      %p72 = scmp.ne.s32.totalorder %s64, %s66
      %p73 = scmp.eq.s32.totalorder %s23, 1
      %p74 = por %p72, %p73
      %p75 = scmp.ne.s32.totalorder %s66, %s67
      %p76 = scmp.eq.s32.totalorder %s23, 0
      %p77 = por %p75, %p76
      %p78 = scmp.ne.s32.totalorder %s66, %s67
      %p79 = scmp.eq.s32.totalorder %s24, 1
      %p80 = por %p78, %p79
      %p82 = scmp.ne.s32.totalorder %s67, %s81
      %p83 = scmp.eq.s32.totalorder %s24, 0
      %p84 = por %p82, %p83
      %s86 = sadd.s32 %s85, 1
      %p89 = scmp.eq.s32.totalorder %s18, 1
      %p90 = scmp.ne.s32.totalorder %s85, %s87
      %p91 = scmp.eq.s32.totalorder %s18, 0
      %p92 = por %p90, %p91
      %p93 = scmp.ne.s32.totalorder %s85, %s87
      %p94 = scmp.eq.s32.totalorder %s23, 1
      %p95 = por %p93, %p94
      %p96 = scmp.ne.s32.totalorder %s87, %s88
      %p97 = scmp.eq.s32.totalorder %s23, 0
      %p98 = por %p96, %p97
      %p99 = scmp.ne.s32.totalorder %s87, %s88
      %p100 = scmp.eq.s32.totalorder %s24, 1
      %p101 = por %p99, %p100
      %p103 = scmp.ne.s32.totalorder %s88, %s102
      %p104 = scmp.eq.s32.totalorder %s24, 0
      %p105 = por %p103, %p104
      %s107 = sadd.s32 %s106, 1
      %p110 = scmp.eq.s32.totalorder %s18, 1
      %p111 = scmp.ne.s32.totalorder %s106, %s108
      %p112 = scmp.eq.s32.totalorder %s18, 0
      %p113 = por %p111, %p112
      %p114 = scmp.ne.s32.totalorder %s106, %s108
      %p115 = scmp.eq.s32.totalorder %s23, 1
      %p116 = por %p114, %p115
      %p117 = scmp.ne.s32.totalorder %s108, %s109
      %p118 = scmp.eq.s32.totalorder %s23, 0
      %p119 = por %p117, %p118
      %p120 = scmp.ne.s32.totalorder %s108, %s109
      %p121 = scmp.eq.s32.totalorder %s24, 1
      %p122 = por %p120, %p121
      %p124 = scmp.ne.s32.totalorder %s109, %s123
      %p125 = scmp.eq.s32.totalorder %s24, 0
      %p126 = por %p124, %p125
      %s128 = sadd.s32 %s127, 1
      %p131 = scmp.eq.s32.totalorder %s18, 1
      %p132 = scmp.ne.s32.totalorder %s127, %s129
      %p133 = scmp.eq.s32.totalorder %s18, 0
      %p134 = por %p132, %p133
      %p135 = scmp.ne.s32.totalorder %s127, %s129
      %p136 = scmp.eq.s32.totalorder %s23, 1
      %p137 = por %p135, %p136
      %p138 = scmp.ne.s32.totalorder %s129, %s130
      %p139 = scmp.eq.s32.totalorder %s23, 0
      %p140 = por %p138, %p139
      %p141 = scmp.ne.s32.totalorder %s129, %s130
      %p142 = scmp.eq.s32.totalorder %s24, 1
      %p143 = por %p141, %p142
      %p145 = scmp.ne.s32.totalorder %s130, %s144
      %p146 = scmp.eq.s32.totalorder %s24, 0
      %p147 = por %p145, %p146
      %s149 = sadd.s32 %s148, 1
      %p152 = scmp.eq.s32.totalorder %s18, 1
      %p153 = scmp.ne.s32.totalorder %s148, %s150
      %p154 = scmp.eq.s32.totalorder %s18, 0
      %p155 = por %p153, %p154
      %p156 = scmp.ne.s32.totalorder %s148, %s150
      %p157 = scmp.eq.s32.totalorder %s23, 1
      %p158 = por %p156, %p157
      %p159 = scmp.ne.s32.totalorder %s150, %s151
      %p160 = scmp.eq.s32.totalorder %s23, 0
      %p161 = por %p159, %p160
      %p162 = scmp.ne.s32.totalorder %s150, %s151
      %p163 = scmp.eq.s32.totalorder %s24, 1
      %p164 = por %p162, %p163
      %p166 = scmp.ne.s32.totalorder %s151, %s165
      %p167 = scmp.eq.s32.totalorder %s24, 0
      %p168 = por %p166, %p167
      %s170 = sadd.s32 %s169, 1
      %p173 = scmp.eq.s32.totalorder %s18, 1
      %p174 = scmp.ne.s32.totalorder %s169, %s171
      %p175 = scmp.eq.s32.totalorder %s18, 0
      %p176 = por %p174, %p175
      %p177 = scmp.ne.s32.totalorder %s169, %s171
      %p178 = scmp.eq.s32.totalorder %s23, 1
      %p179 = por %p177, %p178
      %p180 = scmp.ne.s32.totalorder %s171, %s172
      %p181 = scmp.eq.s32.totalorder %s23, 0
      %p182 = por %p180, %p181
      %p183 = scmp.ne.s32.totalorder %s171, %s172
      %p184 = scmp.eq.s32.totalorder %s24, 1
      %p185 = por %p183, %p184
      %p187 = scmp.ne.s32.totalorder %s172, %s186
      %p188 = scmp.eq.s32.totalorder %s24, 0
      %p189 = por %p187, %p188
      %s190 = ssub.s32 %s26, %s33
      %p191 = scmp.eq.s32.totalorder %s190, 0
      %s193 = sadd.s32 %s192, 1
      %s194 = scalar_select %p191, %s192, %s193
      %p197 = pneg %p191
      %p198 = scmp.eq.s32.totalorder %s18, 1
      %p199 = por %p197, %p198
      %p200 = scmp.ne.s32.totalorder %s192, %s195
      %p201 = scmp.eq.s32.totalorder %s18, 0
      %p202 = por %p200, %p201
      %p203 = scmp.ne.s32.totalorder %s192, %s195
      %p204 = scmp.eq.s32.totalorder %s23, 1
      %p205 = por %p203, %p204
      %p206 = scmp.ne.s32.totalorder %s195, %s196
      %p207 = scmp.eq.s32.totalorder %s23, 0
      %p208 = por %p206, %p207
      %p209 = scmp.ne.s32.totalorder %s195, %s196
      %p210 = scmp.eq.s32.totalorder %s24, 1
      %p211 = por %p209, %p210
      %p213 = scmp.ne.s32.totalorder %s196, %s212
      %p214 = scmp.eq.s32.totalorder %s24, 0
      %p215 = por %p213, %p214
      %s216 = ssub.s32 %s26, %s33
      %p217 = scmp.eq.s32.totalorder %s216, 0
      %s219 = sadd.s32 %s218, 1
      %s220 = scalar_select %p217, %s218, %s219
      %p223 = pneg %p217
      %p224 = scmp.eq.s32.totalorder %s18, 1
      %p225 = por %p223, %p224
      %p226 = scmp.ne.s32.totalorder %s218, %s221
      %p227 = scmp.eq.s32.totalorder %s18, 0
      %p228 = por %p226, %p227
      %p229 = scmp.ne.s32.totalorder %s218, %s221
      %p230 = scmp.eq.s32.totalorder %s23, 1
      %p231 = por %p229, %p230
      %p232 = scmp.ne.s32.totalorder %s221, %s222
      %p233 = scmp.eq.s32.totalorder %s23, 0
      %p234 = por %p232, %p233
      %p235 = scmp.ne.s32.totalorder %s221, %s222
      %p236 = scmp.eq.s32.totalorder %s24, 1
      %p237 = por %p235, %p236
      %p239 = scmp.ne.s32.totalorder %s222, %s238
      %p240 = scmp.eq.s32.totalorder %s24, 0
      %p241 = por %p239, %p240
      %s242 = ssub.s32 %s26, %s33
      %p243 = scmp.eq.s32.totalorder %s242, 0
      %s245 = sadd.s32 %s244, 1
      %s246 = scalar_select %p243, %s244, %s245
      %p249 = pneg %p243
      %p250 = scmp.eq.s32.totalorder %s18, 1
      %p251 = por %p249, %p250
      %p252 = scmp.ne.s32.totalorder %s244, %s247
      %p253 = scmp.eq.s32.totalorder %s18, 0
      %p254 = por %p252, %p253
      %p255 = scmp.ne.s32.totalorder %s244, %s247
      %p256 = scmp.eq.s32.totalorder %s23, 1
      %p257 = por %p255, %p256
      %p258 = scmp.ne.s32.totalorder %s247, %s248
      %p259 = scmp.eq.s32.totalorder %s23, 0
      %p260 = por %p258, %p259
      %p261 = scmp.ne.s32.totalorder %s247, %s248
      %p262 = scmp.eq.s32.totalorder %s24, 1
      %p263 = por %p261, %p262
      %p265 = scmp.ne.s32.totalorder %s248, %s264
      %p266 = scmp.eq.s32.totalorder %s24, 0
      %p267 = por %p265, %p266
      %s269 = sadd.s32 %s268, 1
      %p272 = scmp.eq.s32.totalorder %s18, 1
      %p273 = scmp.ne.s32.totalorder %s268, %s270
      %p274 = scmp.eq.s32.totalorder %s18, 0
      %p275 = por %p273, %p274
      %p276 = scmp.ne.s32.totalorder %s268, %s270
      %p277 = scmp.eq.s32.totalorder %s23, 1
      %p278 = por %p276, %p277
      %p279 = scmp.ne.s32.totalorder %s270, %s271
      %p280 = scmp.eq.s32.totalorder %s23, 0
      %p281 = por %p279, %p280
      %p282 = scmp.ne.s32.totalorder %s270, %s271
      %p283 = scmp.eq.s32.totalorder %s24, 1
      %p284 = por %p282, %p283
      %p286 = scmp.ne.s32.totalorder %s271, %s285
      %p287 = scmp.eq.s32.totalorder %s24, 0
      %p288 = por %p286, %p287
      %s289 = ssub.s32 %s25, %s37
      %p290 = scmp.eq.s32.totalorder %s289, 0
      %s292 = sadd.s32 %s291, 1
      %s293 = scalar_select %p290, %s291, %s292
      %p296 = pneg %p290
      %p297 = scmp.eq.s32.totalorder %s18, 1
      %p298 = por %p296, %p297
      %p299 = scmp.ne.s32.totalorder %s291, %s294
      %p300 = scmp.eq.s32.totalorder %s18, 0
      %p301 = por %p299, %p300
      %p302 = scmp.ne.s32.totalorder %s291, %s294
      %p303 = scmp.eq.s32.totalorder %s23, 1
      %p304 = por %p302, %p303
      %p305 = scmp.ne.s32.totalorder %s294, %s295
      %p306 = scmp.eq.s32.totalorder %s23, 0
      %p307 = por %p305, %p306
      %p308 = scmp.ne.s32.totalorder %s294, %s295
      %p309 = scmp.eq.s32.totalorder %s24, 1
      %p310 = por %p308, %p309
      %p312 = scmp.ne.s32.totalorder %s295, %s311
      %p313 = scmp.eq.s32.totalorder %s24, 0
      %p314 = por %p312, %p313
      %p315 = scmp.le.s32.totalorder 1, %s18
      %p316 = scmp.lt.s32.totalorder %s18, 3
      %p317 = pnand %p315, %p316
      %p318 = pneg %p317
      // Predicated region
      $region9: #{tpu_custom_call.1} parent=5 // pred_check
        _
      $region10: #{tpu_custom_call.1} parent=5 // pred_check_branch
        %320 = sbr.rel (%p317) target = $region12
      $region11: #{tpu_custom_call.1} parent=5 // pred_region
        %s321 = ssub.s32 %s18, 1
        // Predicated region
        $region13: #{tpu_custom_call.1} parent=11 // pred_check
          %p322 = pneg %p56
        $region14: #{tpu_custom_call.1} parent=11 // pred_check_branch
          %324 = sbr.rel (%p322) target = $region16
        $region15: #{tpu_custom_call.1} parent=11 // pred_region
          %s325 = smul.u32 2, %s27
          %p326 = scmp.lt.s32.totalorder %s325, 1
          %s327 = scalar_select %p326, %s325, 1
          %s328 = smul.addr %s327, 8
          %s329 = scalar_lea.vmem %s0, %s328
          %s330 = smul.u32 2, %s27
        $region16: #{tpu_custom_call.1} parent=11 // pred_fallthru
          _
        // Predicated region
        $region17: #{tpu_custom_call.1} parent=11 // pred_check
          %p331 = pneg %p77
        $region18: #{tpu_custom_call.1} parent=11 // pred_check_branch
          %333 = sbr.rel (%p331) target = $region20
        $region19: #{tpu_custom_call.1} parent=11 // pred_region
          _
        $region20: #{tpu_custom_call.1} parent=11 // pred_fallthru
          _
        // Predicated region
        $region21: #{tpu_custom_call.1} parent=11 // pred_check
          %p334 = pneg %p98
        $region22: #{tpu_custom_call.1} parent=11 // pred_check_branch
          %336 = sbr.rel (%p334) target = $region24
        $region23: #{tpu_custom_call.1} parent=11 // pred_region
          _
        $region24: #{tpu_custom_call.1} parent=11 // pred_fallthru
          _
        // Predicated region
        $region25: #{tpu_custom_call.1} parent=11 // pred_check
          %p337 = pneg %p119
        $region26: #{tpu_custom_call.1} parent=11 // pred_check_branch
          %339 = sbr.rel (%p337) target = $region28
        $region27: #{tpu_custom_call.1} parent=11 // pred_region
          _
        $region28: #{tpu_custom_call.1} parent=11 // pred_fallthru
          _
        // Predicated region
        $region29: #{tpu_custom_call.1} parent=11 // pred_check
          %p340 = pneg %p140
        $region30: #{tpu_custom_call.1} parent=11 // pred_check_branch
          %342 = sbr.rel (%p340) target = $region32
        $region31: #{tpu_custom_call.1} parent=11 // pred_region
          _
        $region32: #{tpu_custom_call.1} parent=11 // pred_fallthru
          _
        // Predicated region
        $region33: #{tpu_custom_call.1} parent=11 // pred_check
          %p343 = pneg %p161
        $region34: #{tpu_custom_call.1} parent=11 // pred_check_branch
          %345 = sbr.rel (%p343) target = $region36
        $region35: #{tpu_custom_call.1} parent=11 // pred_region
          _
        $region36: #{tpu_custom_call.1} parent=11 // pred_fallthru
          _
        // Predicated region
        $region37: #{tpu_custom_call.1} parent=11 // pred_check
          %p346 = pneg %p182
        $region38: #{tpu_custom_call.1} parent=11 // pred_check_branch
          %348 = sbr.rel (%p346) target = $region40
        $region39: #{tpu_custom_call.1} parent=11 // pred_region
          _
        $region40: #{tpu_custom_call.1} parent=11 // pred_fallthru
          _
        // Predicated region
        $region41: #{tpu_custom_call.1} parent=11 // pred_check
          %p349 = pneg %p281
        $region42: #{tpu_custom_call.1} parent=11 // pred_check_branch
          %351 = sbr.rel (%p349) target = $region44
        $region43: #{tpu_custom_call.1} parent=11 // pred_region
          _
        $region44: #{tpu_custom_call.1} parent=11 // pred_fallthru
          _
      $region12: #{tpu_custom_call.1} parent=5 // pred_fallthru
        _
      %p352 = scmp.lt.s32.totalorder %s18, 2
      // Predicated region
      $region45: #{tpu_custom_call.1} parent=5 // pred_check
        %p353 = pneg %p352
      $region46: #{tpu_custom_call.1} parent=5 // pred_check_branch
        %355 = sbr.rel (%p353) target = $region48
      $region47: #{tpu_custom_call.1} parent=5 // pred_region
        // Predicated region
        $region49: #{tpu_custom_call.1} parent=47 // pred_check
          %p356 = pneg %p202
        $region50: #{tpu_custom_call.1} parent=47 // pred_check_branch
          %358 = sbr.rel (%p356) target = $region52
        $region51: #{tpu_custom_call.1} parent=47 // pred_region
          %s359 = sand.u32 %s192, 1
          %s360 = sand.u32 %s192, 1
          %s361 = smul.addr %s360, 32
          %s362 = scalar_lea.vmem [#allocation4], %s361
          %s363 = smul.addr %s26, 4
          %s364 = scalar_lea.vmem %s7, %s363
          // Predicated region
          $region53: #{tpu_custom_call.1} parent=51 // pred_check
            _
          $region54: #{tpu_custom_call.1} parent=51 // pred_check_branch
            %366 = sbr.rel (0) target = $region56
          $region55: #{tpu_custom_call.1} parent=51 // pred_region
            // Predicated region
            $region57: #{tpu_custom_call.1} parent=55 // pred_check
              _
            $region58: #{tpu_custom_call.1} parent=55 // pred_check_branch
              %368 = sbr.rel target = $region60
            $region59: #{tpu_custom_call.1} parent=55 // pred_region
              // Predicated region
              $region72: #{tpu_custom_call.1} parent=59 // pred_check
                _
              $region73: #{tpu_custom_call.1} parent=59 // pred_check_branch
                %397 = sbr.rel (0) target = $region75
              $region74: #{tpu_custom_call.1} parent=59 // pred_region
                loop: start=0, step=1, limit=1
                $region76: #{tpu_custom_call.1} parent=74 // loop_pre_header
                  _
                $region77: #{tpu_custom_call.1} parent=74 // loop_header
                  %s399 = sphi 0, %s403
                  %p400 = scmp.ge.s32.totalorder %s399, 1
                  %s404 = sphi %s364, %s364
                  %s405 = sphi %s362, %s362
                $region78: #{tpu_custom_call.1} parent=74 // loop_header_branch
                  %402 = sbr.rel (%p400) target = $region82
                $region79: #{tpu_custom_call.1} parent=74 // loop_body
                  _
                $region80: #{tpu_custom_call.1} parent=74 // loop_footer
                  %s403 = sadd.s32 1, %s399
                $region81: #{tpu_custom_call.1} parent=74 // loop_footer_branch
                  %398 = sbr.rel target = $region77
                $region82: #{tpu_custom_call.1} parent=74 // loop_exit
                  _
                loop: start=0, step=1, limit=1
                $region83: #{tpu_custom_call.1} parent=74 // loop_pre_header
                  _
                $region84: #{tpu_custom_call.1} parent=74 // loop_header
                  %s408 = sphi 0, %s412
                  %p409 = scmp.ge.s32.totalorder %s408, 1
                  %s413 = sphi %s364, %s364
                  %s414 = sphi %s362, %s362
                $region85: #{tpu_custom_call.1} parent=74 // loop_header_branch
                  %411 = sbr.rel (%p409) target = $region89
                $region86: #{tpu_custom_call.1} parent=74 // loop_body
                  %v415 = vld [vmem:[%s413] sm:$0xf]
                  %416 = vst [vmem:[%s414] sm:$0xf] %v415
                  %v417 = vld [vmem:[%s413 + $0x8] sm:$0xf]
                  %418 = vst [vmem:[%s414 + $0x4] sm:$0xf] %v417
                  %v419 = vld [vmem:[%s413 + $0x10] sm:$0xf]
                  %420 = vst [vmem:[%s414 + $0x8] sm:$0xf] %v419
                  %v421 = vld [vmem:[%s413 + $0x18] sm:$0xf]
                  %422 = vst [vmem:[%s414 + $0xc] sm:$0xf] %v421
                  %v423 = vld [vmem:[%s413 + $0x20] sm:$0xf]
                  %424 = vst [vmem:[%s414 + $0x10] sm:$0xf] %v423
                  %v425 = vld [vmem:[%s413 + $0x28] sm:$0xf]
                  %426 = vst [vmem:[%s414 + $0x14] sm:$0xf] %v425
                  %v427 = vld [vmem:[%s413 + $0x30] sm:$0xf]
                  %428 = vst [vmem:[%s414 + $0x18] sm:$0xf] %v427
                  %v429 = vld [vmem:[%s413 + $0x38] sm:$0xf]
                  %430 = vst [vmem:[%s414 + $0x1c] sm:$0xf] %v429
                $region87: #{tpu_custom_call.1} parent=74 // loop_footer
                  %s412 = sadd.s32 1, %s408
                $region88: #{tpu_custom_call.1} parent=74 // loop_footer_branch
                  %407 = sbr.rel target = $region84
                $region89: #{tpu_custom_call.1} parent=74 // loop_exit
                  _
              $region75: #{tpu_custom_call.1} parent=59 // pred_fallthru
                _
            $region60: #{tpu_custom_call.1} parent=55 // pred_fallthru
              _
            // Predicated region
            $region61: #{tpu_custom_call.1} parent=55 // pred_check
              _
            $region62: #{tpu_custom_call.1} parent=55 // pred_check_branch
              %370 = sbr.rel (0) target = $region64
            $region63: #{tpu_custom_call.1} parent=55 // pred_region
              loop: start=0, step=1, limit=1
              $region65: #{tpu_custom_call.1} parent=63 // loop_pre_header
                _
              $region66: #{tpu_custom_call.1} parent=63 // loop_header
                %s373 = sphi 0, %s377
                %p374 = scmp.ge.s32.totalorder %s373, 1
                %s378 = sphi %s364, %s364
                %s379 = sphi %s362, %s362
              $region67: #{tpu_custom_call.1} parent=63 // loop_header_branch
                %376 = sbr.rel (%p374) target = $region71
              $region68: #{tpu_custom_call.1} parent=63 // loop_body
                %v380 = vld [vmem:[%s378] sm:$0xf]
                %381 = vst [vmem:[%s379] sm:$0xf] %v380
                %v382 = vld [vmem:[%s378 + $0x8] sm:$0xf]
                %383 = vst [vmem:[%s379 + $0x4] sm:$0xf] %v382
                %v384 = vld [vmem:[%s378 + $0x10] sm:$0xf]
                %385 = vst [vmem:[%s379 + $0x8] sm:$0xf] %v384
                %v386 = vld [vmem:[%s378 + $0x18] sm:$0xf]
                %387 = vst [vmem:[%s379 + $0xc] sm:$0xf] %v386
                %v388 = vld [vmem:[%s378 + $0x20] sm:$0xf]
                %389 = vst [vmem:[%s379 + $0x10] sm:$0xf] %v388
                %v390 = vld [vmem:[%s378 + $0x28] sm:$0xf]
                %391 = vst [vmem:[%s379 + $0x14] sm:$0xf] %v390
                %v392 = vld [vmem:[%s378 + $0x30] sm:$0xf]
                %393 = vst [vmem:[%s379 + $0x18] sm:$0xf] %v392
                %v394 = vld [vmem:[%s378 + $0x38] sm:$0xf]
                %395 = vst [vmem:[%s379 + $0x1c] sm:$0xf] %v394
              $region69: #{tpu_custom_call.1} parent=63 // loop_footer
                %s377 = sadd.s32 1, %s373
              $region70: #{tpu_custom_call.1} parent=63 // loop_footer_branch
                %372 = sbr.rel target = $region66
              $region71: #{tpu_custom_call.1} parent=63 // loop_exit
                _
            $region64: #{tpu_custom_call.1} parent=55 // pred_fallthru
              _
          $region56: #{tpu_custom_call.1} parent=51 // pred_fallthru
            _
          %431 = vnop
        $region52: #{tpu_custom_call.1} parent=47 // pred_fallthru
          _
        // Predicated region
        $region90: #{tpu_custom_call.1} parent=47 // pred_check
          %p432 = pneg %p228
        $region91: #{tpu_custom_call.1} parent=47 // pred_check_branch
          %434 = sbr.rel (%p432) target = $region93
        $region92: #{tpu_custom_call.1} parent=47 // pred_region
          %p435 = scmp.lt.s32.totalorder %s26, 1
          %s436 = scalar_select %p435, %s26, 1
          %s437 = scalar_lea.vmem %s8, %s436
        $region93: #{tpu_custom_call.1} parent=47 // pred_fallthru
          _
        // Predicated region
        $region94: #{tpu_custom_call.1} parent=47 // pred_check
          %p438 = pneg %p254
        $region95: #{tpu_custom_call.1} parent=47 // pred_check_branch
          %440 = sbr.rel (%p438) target = $region97
        $region96: #{tpu_custom_call.1} parent=47 // pred_region
          %s441 = smul.u32 16, %s26
          %p442 = scmp.lt.s32.totalorder %s441, 31
          %s443 = scalar_select %p442, %s441, 31
          %s444 = smul.addr %s443, 4
          %s445 = scalar_lea.vmem %s9, %s444
          %s446 = smul.u32 16, %s26
        $region97: #{tpu_custom_call.1} parent=47 // pred_fallthru
          _
      $region48: #{tpu_custom_call.1} parent=5 // pred_fallthru
        _
      %p447 = scmp.le.s32.totalorder 1, %s18
      %p448 = scmp.lt.s32.totalorder %s18, 3
      %p449 = pnand %p447, %p448
      %p450 = pneg %p449
      // Predicated region
      $region98: #{tpu_custom_call.1} parent=5 // pred_check
        _
      $region99: #{tpu_custom_call.1} parent=5 // pred_check_branch
        %452 = sbr.rel (%p449) target = $region101
      $region100: #{tpu_custom_call.1} parent=5 // pred_region
        %s453 = ssub.s32 %s18, 1
        %s454 = sand.u32 %s195, 1
        %s455 = sand.u32 %s195, 1
        %s456 = smul.addr %s455, 32
        %s457 = scalar_lea.vmem [#allocation4], %s456
        // Predicated region
        $region102: #{tpu_custom_call.1} parent=100 // pred_check
          %p458 = pneg %p208
        $region103: #{tpu_custom_call.1} parent=100 // pred_check_branch
          %460 = sbr.rel (%p458) target = $region105
        $region104: #{tpu_custom_call.1} parent=100 // pred_region
          _
        $region105: #{tpu_custom_call.1} parent=100 // pred_fallthru
          _
        %s461 = smul.u32 2, %s27
        %p462 = scmp.lt.s32.totalorder %s461, 1
        %s463 = scalar_select %p462, %s461, 1
        %s464 = smul.addr %s463, 8
        %s465 = scalar_lea.vmem %s0, %s464
        %p466 = pneg %p56
        %p467 = pneg %p53
        %p468 = pneg %p77
        %p469 = pneg %p74
        %p470 = pneg %p98
        %p471 = pneg %p95
        %p472 = pneg %p119
        %p473 = pneg %p116
        %p474 = pneg %p140
        %p475 = pneg %p137
        %p476 = pneg %p161
        %p477 = pneg %p158
        %p478 = pneg %p182
        %p479 = pneg %p179
        %s480 = sand.u32 %s195, 1
        %s481 = sand.u32 %s195, 1
        %s482 = smul.addr %s481, 32
        %s483 = scalar_lea.vmem [#allocation4], %s482
        %p484 = pneg %p208
        %p485 = pneg %p205
        %p486 = scmp.lt.s32.totalorder %s28, 1
        %s487 = scalar_select %p486, %s28, 1
        %s488 = scalar_lea.vmem %s8, %s487
        %p489 = pneg %p234
        %p490 = pneg %p231
        %s491 = smul.u32 16, %s28
        %p492 = scmp.lt.s32.totalorder %s491, 31
        %s493 = scalar_select %p492, %s491, 31
        %s494 = smul.addr %s493, 4
        %s495 = scalar_lea.vmem %s9, %s494
        %p496 = pneg %p260
        %p497 = pneg %p257
        %p498 = pneg %p281
        %p499 = pneg %p278
        %p500 = pneg %p307
        %p501 = pneg %p304
        %s502 = smul.u32 2, %s27
        %p503 = scmp.lt.s32.totalorder %s502, 1
        %s504 = scalar_select %p503, %s502, 1
        %s505 = smul.addr %s504, 8
        %s506 = scalar_lea.vmem %s0, %s505
        %s507 = smul.u32 2, %s27
        %p508 = scmp.lt.s32.totalorder %s28, 1
        %s509 = scalar_select %p508, %s28, 1
        %s510 = scalar_lea.vmem %s8, %s509
        %s511 = smul.u32 16, %s28
        %p512 = scmp.lt.s32.totalorder %s511, 31
        %s513 = scalar_select %p512, %s511, 31
        %s514 = smul.addr %s513, 4
        %s515 = scalar_lea.vmem %s9, %s514
        %s516 = smul.u32 16, %s28
        %s517 = smul.u32 2, %s27
        %p519 = scmp.eq.s32.totalorder %s28, 0
        // Predicated region
        $region106: #{tpu_custom_call.1} parent=100 // pred_check
          %p520 = pneg %p519
        $region107: #{tpu_custom_call.1} parent=100 // pred_check_branch
          %522 = sbr.rel (%p520) target = $region109
        $region108: #{tpu_custom_call.1} parent=100 // pred_region
          %v523 = vld [vmem:[%s506] sm:$0xff]
          %v524 = vld [vmem:[%s506 + $0x8] sm:$0xff]
          %v525 = vld [vmem:[%s1] sm:$0x1]
          %v526 = vld [vmem:[%s2] sm:$0x1]
          %vm527 = vcmask 523264
          %v528 = vsel %vm527, %v523, 0.0
          %529 = vadd.xlane.f32.xlu0 %v528
          %v530 = vpop.xlane.xlu0 %529
          %v531 = vsel %vm527, %v524, 0.0
          %532 = vadd.xlane.f32.xlu0 %v531
          %v533 = vpop.xlane.xlu0 %532
          %v534 = vrcp.pop 64.0
          %v535 = vmul.f32 %v530, %v534
          %v536 = vmul.f32 %v533, %v534
          %v537 = vsub.f32 %v523, %v535
          %v538 = vsub.f32 %v524, %v536
          %v539 = vmul.f32 %v537, %v537
          %v540 = vmul.f32 %v538, %v538
          %v541 = vsel %vm527, %v539, 0.0
          %542 = vadd.xlane.f32.xlu0 %v541
          %v543 = vpop.xlane.xlu0 %542
          %v544 = vsel %vm527, %v540, 0.0
          %545 = vadd.xlane.f32.xlu0 %v544
          %v546 = vpop.xlane.xlu0 %545
          %v547 = vmul.f32 %v543, %v534
          %v548 = vmul.f32 %v546, %v534
          %v549 = vadd.f32 %v547, 1e-05
          %v550 = vadd.f32 %v548, 1e-05
          %v551 = vrsqrt.pop %v549
          %v552 = vrsqrt.pop %v550
          %v553 = vmul.f32 %v537, %v551
          %v554 = vmul.f32 %v538, %v552
          %v556 = vlaneseq
          %v557 = vshrl.u32 %v556, 7
          %v558 = vsub.s32 0, %v557
          %v559 = vrot.slane %v525, %v558
          %v561 = vmul.f32 %v553, %v559
          %v562 = vmul.f32 %v554, %v559
          %v564 = vlaneseq
          %v565 = vshrl.u32 %v564, 7
          %v566 = vsub.s32 0, %v565
          %v567 = vrot.slane %v526, %v566
          %v569 = vadd.f32 %v561, %v567
          %v570 = vadd.f32 %v562, %v567
          %v571 = vpack.c.bf16 %v570, %v569
          %v572 = vld [vmem:[%s3] sm:$0xff]
          %v573 = vld [vmem:[%s3 + $0x8] sm:$0xff]
          %v574 = vld [vmem:[%s3 + $0x10] sm:$0xff]
          %v575 = vld [vmem:[%s3 + $0x18] sm:$0xff]
          %v576 = vld [vmem:[%s3 + $0x20] sm:$0xff]
          %v577 = vld [vmem:[%s3 + $0x28] sm:$0xff]
          %v578 = vld [vmem:[%s3 + $0x30] sm:$0xff]
          %v579 = vld [vmem:[%s3 + $0x38] sm:$0xff]
          %v580 = vld [vmem:[%s4] sm:$0x3]
          %v582 = vlaneseq
          %v583 = vshrl.u32 %v582, 7
          %v584 = vsub.s32 0, %v583
          %v585 = vrot.slane %v580, %v584
          %v586 = vlaneseq
          %v587 = vshrl.u32 %v586, 7
          %v588 = vsub.s32 1, %v587
          %v589 = vrot.slane %v580, %v588
          %v600 = vunpack.c.l.b16 %v572
          %v601 = vunpack.c.h.b16 %v572
          %v602 = vunpack.c.l.b16 %v573
          %v603 = vunpack.c.h.b16 %v573
          %v604 = vunpack.c.l.b16 %v574
          %v605 = vunpack.c.h.b16 %v574
          %v606 = vunpack.c.l.b16 %v575
          %v607 = vunpack.c.h.b16 %v575
          %v608 = vunpack.c.l.b16 %v576
          %v609 = vunpack.c.h.b16 %v576
          %v610 = vunpack.c.l.b16 %v577
          %v611 = vunpack.c.h.b16 %v577
          %v612 = vunpack.c.l.b16 %v578
          %v613 = vunpack.c.h.b16 %v578
          %v614 = vunpack.c.l.b16 %v579
          %v615 = vunpack.c.h.b16 %v579
          %v616 = vpack.c.b16 %v602, %v600
          %v617 = vpack.c.b16 %v603, %v601
          %v618 = vpack.c.b16 %v606, %v604
          %v619 = vpack.c.b16 %v607, %v605
          %v620 = vpack.c.b16 %v610, %v608
          %v621 = vpack.c.b16 %v611, %v609
          %v622 = vpack.c.b16 %v614, %v612
          %v623 = vpack.c.b16 %v615, %v613
          %v633 = vsel %vm527, %v571, 0
          %635 = vmatprep.subr.bf16.mxu0 %v617
          %636 = vmatpush1.bf16.msra.mxu0 %v616
          %637 = vmatprep.subr.bf16.mxu0 %v619
          %638 = vmatpush1.bf16.msra.mxu0 %v618
          %639 = vmatprep.subr.bf16.mxu0 %v621
          %640 = vmatpush1.bf16.msra.mxu0 %v620
          %641 = vmatprep.subr.bf16.mxu0 %v623
          %642 = vmatpush1.bf16.msra.mxu0 %v622
          %643 = vmatprep.subr.bf16.mxu0 0
          %644 = vmatpush1.bf16.msra.mxu0 0
          %645 = vmatprep.subr.bf16.mxu0 0
          %646 = vmatpush1.bf16.msra.mxu0 0
          %647 = vmatprep.subr.bf16.mxu0 0
          %648 = vmatpush1.bf16.msra.mxu0 0
          %649 = vmatprep.subr.bf16.mxu0 0
          %650 = vmatpush1.bf16.msra.mxu0 0
          %651 = vmatprep.subr.bf16.mxu0 0
          %652 = vmatpush1.bf16.msra.mxu0 0
          %653 = vmatprep.subr.bf16.mxu0 0
          %654 = vmatpush1.bf16.msra.mxu0 0
          %655 = vmatprep.subr.bf16.mxu0 0
          %656 = vmatpush1.bf16.msra.mxu0 0
          %657 = vmatprep.subr.bf16.mxu0 0
          %658 = vmatpush1.bf16.msra.mxu0 0
          %659 = vmatprep.subr.bf16.mxu0 0
          %660 = vmatpush1.bf16.msra.mxu0 0
          %661 = vmatprep.subr.bf16.mxu0 0
          %662 = vmatpush1.bf16.msra.mxu0 0
          %663 = vmatprep.subr.bf16.mxu0 0
          %664 = vmatpush1.bf16.msra.mxu0 0
          %665 = vmatprep.subr.bf16.mxu0 0
          %666 = vmatpush1.bf16.msra.mxu0 0
          %667 = vmatprep.mubr.bf16.mxu0 0
          %668 = vmatmul.mubr.bf16.gmra.mrb[0].mxu0 %v633
          %v669 = vpop.f32.mrb[0].mxu0
          %v670 = vadd.f32 %v585, %v669
          %v671 = vpop.f32.mrb[0].mxu0
          %v672 = vadd.f32 %v589, %v671
          %v673 = vpop.f32.mrb[0].mxu0
          %v674 = vadd.f32 %v585, %v673
          %v675 = vpop.f32.mrb[0].mxu0
          %v676 = vadd.f32 %v589, %v675
          %677 = vdwg.mxu0
          %v678 = vpack.c.bf16 %v674, %v670
          %v679 = vpack.c.bf16 %v676, %v672
          %v680 = vlaneseq
          %v681 = vshrl.u32 %v680, 7
          %v682 = vlaneseq
          %v683 = vand.u32 %v682, 127
          %vm684 = vcmp.ge.s32.totalorder %v681, %v683
          %v685 = vsel %vm684, 0.0, -1e+20
          %687 = vrot.lane.b32.xlu0 %v678, 64
          %v688 = vpop.permute.xlu0 %687
          %vm689 = vcmask 130048
          %v691 = vsel %vm689, %v678, 0
          %v694 = vsel %vm689, %v688, 0
          %696 = vmatprep.subr.bf16.mxu0 0
          %697 = vmatpush1.bf16.xpose.msra.mxu0 %v694
          %698 = vmatprep.subr.bf16.mxu0 0
          %699 = vmatpush1.bf16.xpose.msra.mxu0 0
          %700 = vmatprep.subr.bf16.mxu0 0
          %701 = vmatpush1.bf16.xpose.msra.mxu0 0
          %702 = vmatprep.subr.bf16.mxu0 0
          %703 = vmatpush1.bf16.xpose.msra.mxu0 0
          %704 = vmatprep.subr.bf16.mxu0 0
          %705 = vmatpush1.bf16.xpose.msra.mxu0 0
          %706 = vmatprep.subr.bf16.mxu0 0
          %707 = vmatpush1.bf16.xpose.msra.mxu0 0
          %708 = vmatprep.subr.bf16.mxu0 0
          %709 = vmatpush1.bf16.xpose.msra.mxu0 0
          %710 = vmatprep.subr.bf16.mxu0 0
          %711 = vmatpush1.bf16.xpose.msra.mxu0 0
          %712 = vmatprep.subr.bf16.mxu0 0
          %713 = vmatpush1.bf16.xpose.msra.mxu0 0
          %714 = vmatprep.subr.bf16.mxu0 0
          %715 = vmatpush1.bf16.xpose.msra.mxu0 0
          %716 = vmatprep.subr.bf16.mxu0 0
          %717 = vmatpush1.bf16.xpose.msra.mxu0 0
          %718 = vmatprep.subr.bf16.mxu0 0
          %719 = vmatpush1.bf16.xpose.msra.mxu0 0
          %720 = vmatprep.subr.bf16.mxu0 0
          %721 = vmatpush1.bf16.xpose.msra.mxu0 0
          %722 = vmatprep.subr.bf16.mxu0 0
          %723 = vmatpush1.bf16.xpose.msra.mxu0 0
          %724 = vmatprep.subr.bf16.mxu0 0
          %725 = vmatpush1.bf16.xpose.msra.mxu0 0
          %726 = vmatprep.subr.bf16.mxu0 0
          %727 = vmatpush1.bf16.xpose.msra.mxu0 0
          %728 = vmatprep.mubr.bf16.mxu0 0
          %729 = vmatmul.mubr.bf16.gmra.mrb[0].mxu0 %v691
          %v730 = vpop.f32.mrb[0].mxu0
          %v731 = vadd.f32 %v685, %v730
          %v732 = vpop.f32.mrb[0].mxu0
          %v733 = vpop.f32.mrb[0].mxu0
          %v734 = vpop.f32.mrb[0].mxu0
          %735 = vdwg.mxu0
          %vm736 = vcmask 64512
          %v737 = vsel %vm736, %v731, -inf
          %738 = vmax.xlane.f32.xlu0 %v737
          %v739 = vpop.xlane.xlu0 %738
          %v740 = vsub.f32 %v731, %v739
          %v741 = vmul.f32 %v740, 1.442695
          %v742 = vpow.pop %v741
          %v743 = vsel %vm736, %v742, 0.0
          %744 = vadd.xlane.f32.xlu0 %v743
          %v745 = vpop.xlane.xlu0 %744
          %v746 = vrcp.pop %v745
          %v747 = vmul.f32 %v742, %v746
          %v748 = vpack.c.bf16 %v747, %v747
          %v750 = vsel %vm736, %v748, 0
          %vm752 = vcmask 1043456
          %v754 = vsel %vm752, %v679, 0
          %756 = vmatprep.subr.bf16.mxu0 0
          %757 = vmatpush1.bf16.msra.mxu0 %v754
          %758 = vmatprep.subr.bf16.mxu0 0
          %759 = vmatpush1.bf16.msra.mxu0 0
          %760 = vmatprep.subr.bf16.mxu0 0
          %761 = vmatpush1.bf16.msra.mxu0 0
          %762 = vmatprep.subr.bf16.mxu0 0
          %763 = vmatpush1.bf16.msra.mxu0 0
          %764 = vmatprep.subr.bf16.mxu0 0
          %765 = vmatpush1.bf16.msra.mxu0 0
          %766 = vmatprep.subr.bf16.mxu0 0
          %767 = vmatpush1.bf16.msra.mxu0 0
          %768 = vmatprep.subr.bf16.mxu0 0
          %769 = vmatpush1.bf16.msra.mxu0 0
          %770 = vmatprep.subr.bf16.mxu0 0
          %771 = vmatpush1.bf16.msra.mxu0 0
          %772 = vmatprep.subr.bf16.mxu0 0
          %773 = vmatpush1.bf16.msra.mxu0 0
          %774 = vmatprep.subr.bf16.mxu0 0
          %775 = vmatpush1.bf16.msra.mxu0 0
          %776 = vmatprep.subr.bf16.mxu0 0
          %777 = vmatpush1.bf16.msra.mxu0 0
          %778 = vmatprep.subr.bf16.mxu0 0
          %779 = vmatpush1.bf16.msra.mxu0 0
          %780 = vmatprep.subr.bf16.mxu0 0
          %781 = vmatpush1.bf16.msra.mxu0 0
          %782 = vmatprep.subr.bf16.mxu0 0
          %783 = vmatpush1.bf16.msra.mxu0 0
          %784 = vmatprep.subr.bf16.mxu0 0
          %785 = vmatpush1.bf16.msra.mxu0 0
          %786 = vmatprep.subr.bf16.mxu0 0
          %787 = vmatpush1.bf16.msra.mxu0 0
          %788 = vmatprep.mubr.bf16.mxu0 0
          %789 = vmatmul.mubr.bf16.gmra.mrb[0].mxu0 %v750
          %v790 = vpop.f32.mrb[0].mxu0
          %v791 = vadd.f32 0.0, %v790
          %v792 = vpop.f32.mrb[0].mxu0
          %v793 = vpop.f32.mrb[0].mxu0
          %v794 = vpop.f32.mrb[0].mxu0
          %795 = vdwg.mxu0
          %796 = vrot.lane.b32.xlu0 %v678, 112
          %v797 = vpop.permute.xlu0 %796
          %798 = vrot.lane.b32.xlu0 %v678, 48
          %v799 = vpop.permute.xlu0 %798
          %v801 = vsel %vm689, %v797, 0
          %v804 = vsel %vm689, %v799, 0
          %806 = vmatprep.subr.bf16.mxu0 0
          %807 = vmatpush1.bf16.xpose.msra.mxu0 %v804
          %808 = vmatprep.subr.bf16.mxu0 0
          %809 = vmatpush1.bf16.xpose.msra.mxu0 0
          %810 = vmatprep.subr.bf16.mxu0 0
          %811 = vmatpush1.bf16.xpose.msra.mxu0 0
          %812 = vmatprep.subr.bf16.mxu0 0
          %813 = vmatpush1.bf16.xpose.msra.mxu0 0
          %814 = vmatprep.subr.bf16.mxu0 0
          %815 = vmatpush1.bf16.xpose.msra.mxu0 0
          %816 = vmatprep.subr.bf16.mxu0 0
          %817 = vmatpush1.bf16.xpose.msra.mxu0 0
          %818 = vmatprep.subr.bf16.mxu0 0
          %819 = vmatpush1.bf16.xpose.msra.mxu0 0
          %820 = vmatprep.subr.bf16.mxu0 0
          %821 = vmatpush1.bf16.xpose.msra.mxu0 0
          %822 = vmatprep.subr.bf16.mxu0 0
          %823 = vmatpush1.bf16.xpose.msra.mxu0 0
          %824 = vmatprep.subr.bf16.mxu0 0
          %825 = vmatpush1.bf16.xpose.msra.mxu0 0
          %826 = vmatprep.subr.bf16.mxu0 0
          %827 = vmatpush1.bf16.xpose.msra.mxu0 0
          %828 = vmatprep.subr.bf16.mxu0 0
          %829 = vmatpush1.bf16.xpose.msra.mxu0 0
          %830 = vmatprep.subr.bf16.mxu0 0
          %831 = vmatpush1.bf16.xpose.msra.mxu0 0
          %832 = vmatprep.subr.bf16.mxu0 0
          %833 = vmatpush1.bf16.xpose.msra.mxu0 0
          %834 = vmatprep.subr.bf16.mxu0 0
          %835 = vmatpush1.bf16.xpose.msra.mxu0 0
          %836 = vmatprep.subr.bf16.mxu0 0
          %837 = vmatpush1.bf16.xpose.msra.mxu0 0
          %838 = vmatprep.mubr.bf16.mxu0 0
          %839 = vmatmul.mubr.bf16.gmra.mrb[0].mxu0 %v801
          %v840 = vpop.f32.mrb[0].mxu0
          %v841 = vadd.f32 %v685, %v840
          %v842 = vpop.f32.mrb[0].mxu0
          %v843 = vpop.f32.mrb[0].mxu0
          %v844 = vpop.f32.mrb[0].mxu0
          %845 = vdwg.mxu0
          %v846 = vsel %vm736, %v841, -inf
          %847 = vmax.xlane.f32.xlu0 %v846
          %v848 = vpop.xlane.xlu0 %847
          %v849 = vsub.f32 %v841, %v848
          %v850 = vmul.f32 %v849, 1.442695
          %v851 = vpow.pop %v850
          %v852 = vsel %vm736, %v851, 0.0
          %853 = vadd.xlane.f32.xlu0 %v852
          %v854 = vpop.xlane.xlu0 %853
          %v855 = vrcp.pop %v854
          %v856 = vmul.f32 %v851, %v855
          %v857 = vpack.c.bf16 %v856, %v856
          %859 = vrot.lane.b32.xlu0 %v679, 112
          %v860 = vpop.permute.xlu0 %859
          %v862 = vsel %vm736, %v857, 0
          %v865 = vsel %vm752, %v860, 0
          %867 = vmatprep.subr.bf16.mxu0 0
          %868 = vmatpush1.bf16.msra.mxu0 %v865
          %869 = vmatprep.subr.bf16.mxu0 0
          %870 = vmatpush1.bf16.msra.mxu0 0
          %871 = vmatprep.subr.bf16.mxu0 0
          %872 = vmatpush1.bf16.msra.mxu0 0
          %873 = vmatprep.subr.bf16.mxu0 0
          %874 = vmatpush1.bf16.msra.mxu0 0
          %875 = vmatprep.subr.bf16.mxu0 0
          %876 = vmatpush1.bf16.msra.mxu0 0
          %877 = vmatprep.subr.bf16.mxu0 0
          %878 = vmatpush1.bf16.msra.mxu0 0
          %879 = vmatprep.subr.bf16.mxu0 0
          %880 = vmatpush1.bf16.msra.mxu0 0
          %881 = vmatprep.subr.bf16.mxu0 0
          %882 = vmatpush1.bf16.msra.mxu0 0
          %883 = vmatprep.subr.bf16.mxu0 0
          %884 = vmatpush1.bf16.msra.mxu0 0
          %885 = vmatprep.subr.bf16.mxu0 0
          %886 = vmatpush1.bf16.msra.mxu0 0
          %887 = vmatprep.subr.bf16.mxu0 0
          %888 = vmatpush1.bf16.msra.mxu0 0
          %889 = vmatprep.subr.bf16.mxu0 0
          %890 = vmatpush1.bf16.msra.mxu0 0
          %891 = vmatprep.subr.bf16.mxu0 0
          %892 = vmatpush1.bf16.msra.mxu0 0
          %893 = vmatprep.subr.bf16.mxu0 0
          %894 = vmatpush1.bf16.msra.mxu0 0
          %895 = vmatprep.subr.bf16.mxu0 0
          %896 = vmatpush1.bf16.msra.mxu0 0
          %897 = vmatprep.subr.bf16.mxu0 0
          %898 = vmatpush1.bf16.msra.mxu0 0
          %899 = vmatprep.mubr.bf16.mxu0 0
          %900 = vmatmul.mubr.bf16.gmra.mrb[0].mxu0 %v862
          %v901 = vpop.f32.mrb[0].mxu0
          %v902 = vadd.f32 0.0, %v901
          %v903 = vpop.f32.mrb[0].mxu0
          %v904 = vpop.f32.mrb[0].mxu0
          %v905 = vpop.f32.mrb[0].mxu0
          %906 = vdwg.mxu0
          %907 = vrot.lane.b32.xlu0 %v678, 96
          %v908 = vpop.permute.xlu0 %907
          %909 = vrot.lane.b32.xlu0 %v678, 32
          %v910 = vpop.permute.xlu0 %909
          %v912 = vsel %vm689, %v908, 0
          %v915 = vsel %vm689, %v910, 0
          %917 = vmatprep.subr.bf16.mxu0 0
          %918 = vmatpush1.bf16.xpose.msra.mxu0 %v915
          %919 = vmatprep.subr.bf16.mxu0 0
          %920 = vmatpush1.bf16.xpose.msra.mxu0 0
          %921 = vmatprep.subr.bf16.mxu0 0
          %922 = vmatpush1.bf16.xpose.msra.mxu0 0
          %923 = vmatprep.subr.bf16.mxu0 0
          %924 = vmatpush1.bf16.xpose.msra.mxu0 0
          %925 = vmatprep.subr.bf16.mxu0 0
          %926 = vmatpush1.bf16.xpose.msra.mxu0 0
          %927 = vmatprep.subr.bf16.mxu0 0
          %928 = vmatpush1.bf16.xpose.msra.mxu0 0
          %929 = vmatprep.subr.bf16.mxu0 0
          %930 = vmatpush1.bf16.xpose.msra.mxu0 0
          %931 = vmatprep.subr.bf16.mxu0 0
          %932 = vmatpush1.bf16.xpose.msra.mxu0 0
          %933 = vmatprep.subr.bf16.mxu0 0
          %934 = vmatpush1.bf16.xpose.msra.mxu0 0
          %935 = vmatprep.subr.bf16.mxu0 0
          %936 = vmatpush1.bf16.xpose.msra.mxu0 0
          %937 = vmatprep.subr.bf16.mxu0 0
          %938 = vmatpush1.bf16.xpose.msra.mxu0 0
          %939 = vmatprep.subr.bf16.mxu0 0
          %940 = vmatpush1.bf16.xpose.msra.mxu0 0
          %941 = vmatprep.subr.bf16.mxu0 0
          %942 = vmatpush1.bf16.xpose.msra.mxu0 0
          %943 = vmatprep.subr.bf16.mxu0 0
          %944 = vmatpush1.bf16.xpose.msra.mxu0 0
          %945 = vmatprep.subr.bf16.mxu0 0
          %946 = vmatpush1.bf16.xpose.msra.mxu0 0
          %947 = vmatprep.subr.bf16.mxu0 0
          %948 = vmatpush1.bf16.xpose.msra.mxu0 0
          %949 = vmatprep.mubr.bf16.mxu0 0
          %950 = vmatmul.mubr.bf16.gmra.mrb[0].mxu0 %v912
          %v951 = vpop.f32.mrb[0].mxu0
          %v952 = vadd.f32 %v685, %v951
          %v953 = vpop.f32.mrb[0].mxu0
          %v954 = vpop.f32.mrb[0].mxu0
          %v955 = vpop.f32.mrb[0].mxu0
          %956 = vdwg.mxu0
          %v957 = vsel %vm736, %v952, -inf
          %958 = vmax.xlane.f32.xlu0 %v957
          %v959 = vpop.xlane.xlu0 %958
          %v960 = vsub.f32 %v952, %v959
          %v961 = vmul.f32 %v960, 1.442695
          %v962 = vpow.pop %v961
          %v963 = vsel %vm736, %v962, 0.0
          %964 = vadd.xlane.f32.xlu0 %v963
          %v965 = vpop.xlane.xlu0 %964
          %v966 = vrcp.pop %v965
          %v967 = vmul.f32 %v962, %v966
          %v968 = vpack.c.bf16 %v967, %v967
          %969 = vrot.lane.b32.xlu0 %v679, 96
          %v970 = vpop.permute.xlu0 %969
          %v972 = vsel %vm736, %v968, 0
          %v975 = vsel %vm752, %v970, 0
          %977 = vmatprep.subr.bf16.mxu0 0
          %978 = vmatpush1.bf16.msra.mxu0 %v975
          %979 = vmatprep.subr.bf16.mxu0 0
          %980 = vmatpush1.bf16.msra.mxu0 0
          %981 = vmatprep.subr.bf16.mxu0 0
          %982 = vmatpush1.bf16.msra.mxu0 0
          %983 = vmatprep.subr.bf16.mxu0 0
          %984 = vmatpush1.bf16.msra.mxu0 0
          %985 = vmatprep.subr.bf16.mxu0 0
          %986 = vmatpush1.bf16.msra.mxu0 0
          %987 = vmatprep.subr.bf16.mxu0 0
          %988 = vmatpush1.bf16.msra.mxu0 0
          %989 = vmatprep.subr.bf16.mxu0 0
          %990 = vmatpush1.bf16.msra.mxu0 0
          %991 = vmatprep.subr.bf16.mxu0 0
          %992 = vmatpush1.bf16.msra.mxu0 0
          %993 = vmatprep.subr.bf16.mxu0 0
          %994 = vmatpush1.bf16.msra.mxu0 0
          %995 = vmatprep.subr.bf16.mxu0 0
          %996 = vmatpush1.bf16.msra.mxu0 0
          %997 = vmatprep.subr.bf16.mxu0 0
          %998 = vmatpush1.bf16.msra.mxu0 0
          %999 = vmatprep.subr.bf16.mxu0 0
          %1000 = vmatpush1.bf16.msra.mxu0 0
          %1001 = vmatprep.subr.bf16.mxu0 0
          %1002 = vmatpush1.bf16.msra.mxu0 0
          %1003 = vmatprep.subr.bf16.mxu0 0
          %1004 = vmatpush1.bf16.msra.mxu0 0
          %1005 = vmatprep.subr.bf16.mxu0 0
          %1006 = vmatpush1.bf16.msra.mxu0 0
          %1007 = vmatprep.subr.bf16.mxu0 0
          %1008 = vmatpush1.bf16.msra.mxu0 0
          %1009 = vmatprep.mubr.bf16.mxu0 0
          %1010 = vmatmul.mubr.bf16.gmra.mrb[0].mxu0 %v972
          %v1011 = vpop.f32.mrb[0].mxu0
          %v1012 = vadd.f32 0.0, %v1011
          %v1013 = vpop.f32.mrb[0].mxu0
          %v1014 = vpop.f32.mrb[0].mxu0
          %v1015 = vpop.f32.mrb[0].mxu0
          %1016 = vdwg.mxu0
          %1017 = vrot.lane.b32.xlu0 %v678, 80
          %v1018 = vpop.permute.xlu0 %1017
          %1019 = vrot.lane.b32.xlu0 %v678, 16
          %v1020 = vpop.permute.xlu0 %1019
          %v1022 = vsel %vm689, %v1018, 0
          %v1025 = vsel %vm689, %v1020, 0
          %1027 = vmatprep.subr.bf16.mxu0 0
          %1028 = vmatpush1.bf16.xpose.msra.mxu0 %v1025
          %1029 = vmatprep.subr.bf16.mxu0 0
          %1030 = vmatpush1.bf16.xpose.msra.mxu0 0
          %1031 = vmatprep.subr.bf16.mxu0 0
          %1032 = vmatpush1.bf16.xpose.msra.mxu0 0
          %1033 = vmatprep.subr.bf16.mxu0 0
          %1034 = vmatpush1.bf16.xpose.msra.mxu0 0
          %1035 = vmatprep.subr.bf16.mxu0 0
          %1036 = vmatpush1.bf16.xpose.msra.mxu0 0
          %1037 = vmatprep.subr.bf16.mxu0 0
          %1038 = vmatpush1.bf16.xpose.msra.mxu0 0
          %1039 = vmatprep.subr.bf16.mxu0 0
          %1040 = vmatpush1.bf16.xpose.msra.mxu0 0
          %1041 = vmatprep.subr.bf16.mxu0 0
          %1042 = vmatpush1.bf16.xpose.msra.mxu0 0
          %1043 = vmatprep.subr.bf16.mxu0 0
          %1044 = vmatpush1.bf16.xpose.msra.mxu0 0
          %1045 = vmatprep.subr.bf16.mxu0 0
          %1046 = vmatpush1.bf16.xpose.msra.mxu0 0
          %1047 = vmatprep.subr.bf16.mxu0 0
          %1048 = vmatpush1.bf16.xpose.msra.mxu0 0
          %1049 = vmatprep.subr.bf16.mxu0 0
          %1050 = vmatpush1.bf16.xpose.msra.mxu0 0
          %1051 = vmatprep.subr.bf16.mxu0 0
          %1052 = vmatpush1.bf16.xpose.msra.mxu0 0
          %1053 = vmatprep.subr.bf16.mxu0 0
          %1054 = vmatpush1.bf16.xpose.msra.mxu0 0
          %1055 = vmatprep.subr.bf16.mxu0 0
          %1056 = vmatpush1.bf16.xpose.msra.mxu0 0
          %1057 = vmatprep.subr.bf16.mxu0 0
          %1058 = vmatpush1.bf16.xpose.msra.mxu0 0
          %1059 = vmatprep.mubr.bf16.mxu0 0
          %1060 = vmatmul.mubr.bf16.gmra.mrb[0].mxu0 %v1022
          %v1061 = vpop.f32.mrb[0].mxu0
          %v1062 = vadd.f32 %v685, %v1061
          %v1063 = vpop.f32.mrb[0].mxu0
          %v1064 = vpop.f32.mrb[0].mxu0
          %v1065 = vpop.f32.mrb[0].mxu0
          %1066 = vdwg.mxu0
          %v1067 = vsel %vm736, %v1062, -inf
          %1068 = vmax.xlane.f32.xlu0 %v1067
          %v1069 = vpop.xlane.xlu0 %1068
          %v1070 = vsub.f32 %v1062, %v1069
          %v1071 = vmul.f32 %v1070, 1.442695
          %v1072 = vpow.pop %v1071
          %v1073 = vsel %vm736, %v1072, 0.0
          %1074 = vadd.xlane.f32.xlu0 %v1073
          %v1075 = vpop.xlane.xlu0 %1074
          %v1076 = vrcp.pop %v1075
          %v1077 = vmul.f32 %v1072, %v1076
          %v1078 = vpack.c.bf16 %v1077, %v1077
          %1079 = vrot.lane.b32.xlu0 %v679, 80
          %v1080 = vpop.permute.xlu0 %1079
          %v1082 = vsel %vm736, %v1078, 0
          %v1085 = vsel %vm752, %v1080, 0
          %1087 = vmatprep.subr.bf16.mxu0 0
          %1088 = vmatpush1.bf16.msra.mxu0 %v1085
          %1089 = vmatprep.subr.bf16.mxu0 0
          %1090 = vmatpush1.bf16.msra.mxu0 0
          %1091 = vmatprep.subr.bf16.mxu0 0
          %1092 = vmatpush1.bf16.msra.mxu0 0
          %1093 = vmatprep.subr.bf16.mxu0 0
          %1094 = vmatpush1.bf16.msra.mxu0 0
          %1095 = vmatprep.subr.bf16.mxu0 0
          %1096 = vmatpush1.bf16.msra.mxu0 0
          %1097 = vmatprep.subr.bf16.mxu0 0
          %1098 = vmatpush1.bf16.msra.mxu0 0
          %1099 = vmatprep.subr.bf16.mxu0 0
          %1100 = vmatpush1.bf16.msra.mxu0 0
          %1101 = vmatprep.subr.bf16.mxu0 0
          %1102 = vmatpush1.bf16.msra.mxu0 0
          %1103 = vmatprep.subr.bf16.mxu0 0
          %1104 = vmatpush1.bf16.msra.mxu0 0
          %1105 = vmatprep.subr.bf16.mxu0 0
          %1106 = vmatpush1.bf16.msra.mxu0 0
          %1107 = vmatprep.subr.bf16.mxu0 0
          %1108 = vmatpush1.bf16.msra.mxu0 0
          %1109 = vmatprep.subr.bf16.mxu0 0
          %1110 = vmatpush1.bf16.msra.mxu0 0
          %1111 = vmatprep.subr.bf16.mxu0 0
          %1112 = vmatpush1.bf16.msra.mxu0 0
          %1113 = vmatprep.subr.bf16.mxu0 0
          %1114 = vmatpush1.bf16.msra.mxu0 0
          %1115 = vmatprep.subr.bf16.mxu0 0
          %1116 = vmatpush1.bf16.msra.mxu0 0
          %1117 = vmatprep.subr.bf16.mxu0 0
          %1118 = vmatpush1.bf16.msra.mxu0 0
          %1119 = vmatprep.mubr.bf16.mxu0 0
          %1120 = vmatmul.mubr.bf16.gmra.mrb[0].mxu0 %v1082
          %v1121 = vpop.f32.mrb[0].mxu0
          %v1122 = vadd.f32 0.0, %v1121
          %v1123 = vpop.f32.mrb[0].mxu0
          %v1124 = vpop.f32.mrb[0].mxu0
          %v1125 = vpop.f32.mrb[0].mxu0
          %1126 = vdwg.mxu0
          %1128 = vrot.lane.b32.xlu0 %v902, 16
          %v1129 = vpop.permute.xlu0 %1128
          %1132 = vrot.lane.b32.xlu0 %v1012, 32
          %v1133 = vpop.permute.xlu0 %1132
          %1136 = vrot.lane.b32.xlu0 %v1122, 48
          %v1137 = vpop.permute.xlu0 %1136
          %v1139 = vsel %vm689, %v791, %v1129
          %vm1140 = vcmask 261120
          %v1141 = vsel %vm1140, %v1139, %v1133
          %vm1142 = vcmask 392192
          %v1143 = vsel %vm1142, %v1141, %v1137
          %v1144 = vadd.f32 %v523, %v1143
          %v1145 = vrot.slane %v678, 4
          %1146 = vrot.lane.b32.xlu0 %v1145, 64
          %v1147 = vpop.permute.xlu0 %1146
          %v1149 = vsel %vm689, %v1145, 0
          %v1152 = vsel %vm689, %v1147, 0
          %1154 = vmatprep.subr.bf16.mxu0 0
          %1155 = vmatpush1.bf16.xpose.msra.mxu0 %v1152
          %1156 = vmatprep.subr.bf16.mxu0 0
          %1157 = vmatpush1.bf16.xpose.msra.mxu0 0
          %1158 = vmatprep.subr.bf16.mxu0 0
          %1159 = vmatpush1.bf16.xpose.msra.mxu0 0
          %1160 = vmatprep.subr.bf16.mxu0 0
          %1161 = vmatpush1.bf16.xpose.msra.mxu0 0
          %1162 = vmatprep.subr.bf16.mxu0 0
          %1163 = vmatpush1.bf16.xpose.msra.mxu0 0
          %1164 = vmatprep.subr.bf16.mxu0 0
          %1165 = vmatpush1.bf16.xpose.msra.mxu0 0
          %1166 = vmatprep.subr.bf16.mxu0 0
          %1167 = vmatpush1.bf16.xpose.msra.mxu0 0
          %1168 = vmatprep.subr.bf16.mxu0 0
          %1169 = vmatpush1.bf16.xpose.msra.mxu0 0
          %1170 = vmatprep.subr.bf16.mxu0 0
          %1171 = vmatpush1.bf16.xpose.msra.mxu0 0
          %1172 = vmatprep.subr.bf16.mxu0 0
          %1173 = vmatpush1.bf16.xpose.msra.mxu0 0
          %1174 = vmatprep.subr.bf16.mxu0 0
          %1175 = vmatpush1.bf16.xpose.msra.mxu0 0
          %1176 = vmatprep.subr.bf16.mxu0 0
          %1177 = vmatpush1.bf16.xpose.msra.mxu0 0
          %1178 = vmatprep.subr.bf16.mxu0 0
          %1179 = vmatpush1.bf16.xpose.msra.mxu0 0
          %1180 = vmatprep.subr.bf16.mxu0 0
          %1181 = vmatpush1.bf16.xpose.msra.mxu0 0
          %1182 = vmatprep.subr.bf16.mxu0 0
          %1183 = vmatpush1.bf16.xpose.msra.mxu0 0
          %1184 = vmatprep.subr.bf16.mxu0 0
          %1185 = vmatpush1.bf16.xpose.msra.mxu0 0
          %1186 = vmatprep.mubr.bf16.mxu0 0
          %1187 = vmatmul.mubr.bf16.gmra.mrb[0].mxu0 %v1149
          %v1188 = vpop.f32.mrb[0].mxu0
          %v1189 = vadd.f32 %v685, %v1188
          %v1190 = vpop.f32.mrb[0].mxu0
          %v1191 = vpop.f32.mrb[0].mxu0
          %v1192 = vpop.f32.mrb[0].mxu0
          %1193 = vdwg.mxu0
          %v1194 = vsel %vm736, %v1189, -inf
          %1195 = vmax.xlane.f32.xlu0 %v1194
          %v1196 = vpop.xlane.xlu0 %1195
          %v1197 = vsub.f32 %v1189, %v1196
          %v1198 = vmul.f32 %v1197, 1.442695
          %v1199 = vpow.pop %v1198
          %v1200 = vsel %vm736, %v1199, 0.0
          %1201 = vadd.xlane.f32.xlu0 %v1200
          %v1202 = vpop.xlane.xlu0 %1201
          %v1203 = vrcp.pop %v1202
          %v1204 = vmul.f32 %v1199, %v1203
          %v1205 = vpack.c.bf16 %v1204, %v1204
          %v1206 = vrot.slane %v679, 4
          %v1208 = vsel %vm736, %v1205, 0
          %v1211 = vsel %vm752, %v1206, 0
          %1213 = vmatprep.subr.bf16.mxu0 0
          %1214 = vmatpush1.bf16.msra.mxu0 %v1211
          %1215 = vmatprep.subr.bf16.mxu0 0
          %1216 = vmatpush1.bf16.msra.mxu0 0
          %1217 = vmatprep.subr.bf16.mxu0 0
          %1218 = vmatpush1.bf16.msra.mxu0 0
          %1219 = vmatprep.subr.bf16.mxu0 0
          %1220 = vmatpush1.bf16.msra.mxu0 0
          %1221 = vmatprep.subr.bf16.mxu0 0
          %1222 = vmatpush1.bf16.msra.mxu0 0
          %1223 = vmatprep.subr.bf16.mxu0 0
          %1224 = vmatpush1.bf16.msra.mxu0 0
          %1225 = vmatprep.subr.bf16.mxu0 0
          %1226 = vmatpush1.bf16.msra.mxu0 0
          %1227 = vmatprep.subr.bf16.mxu0 0
          %1228 = vmatpush1.bf16.msra.mxu0 0
          %1229 = vmatprep.subr.bf16.mxu0 0
          %1230 = vmatpush1.bf16.msra.mxu0 0
          %1231 = vmatprep.subr.bf16.mxu0 0
          %1232 = vmatpush1.bf16.msra.mxu0 0
          %1233 = vmatprep.subr.bf16.mxu0 0
          %1234 = vmatpush1.bf16.msra.mxu0 0
          %1235 = vmatprep.subr.bf16.mxu0 0
          %1236 = vmatpush1.bf16.msra.mxu0 0
          %1237 = vmatprep.subr.bf16.mxu0 0
          %1238 = vmatpush1.bf16.msra.mxu0 0
          %1239 = vmatprep.subr.bf16.mxu0 0
          %1240 = vmatpush1.bf16.msra.mxu0 0
          %1241 = vmatprep.subr.bf16.mxu0 0
          %1242 = vmatpush1.bf16.msra.mxu0 0
          %1243 = vmatprep.subr.bf16.mxu0 0
          %1244 = vmatpush1.bf16.msra.mxu0 0
          %1245 = vmatprep.mubr.bf16.mxu0 0
          %1246 = vmatmul.mubr.bf16.gmra.mrb[0].mxu0 %v1208
          %v1247 = vpop.f32.mrb[0].mxu0
          %v1248 = vadd.f32 0.0, %v1247
          %v1249 = vpop.f32.mrb[0].mxu0
          %v1250 = vpop.f32.mrb[0].mxu0
          %v1251 = vpop.f32.mrb[0].mxu0
          %1252 = vdwg.mxu0
          %1253 = vrot.lane.b32.xlu0 %v1145, 112
          %v1254 = vpop.permute.xlu0 %1253
          %1255 = vrot.lane.b32.xlu0 %v1145, 48
          %v1256 = vpop.permute.xlu0 %1255
          %v1258 = vsel %vm689, %v1254, 0
          %v1261 = vsel %vm689, %v1256, 0
          %1263 = vmatprep.subr.bf16.mxu0 0
          %1264 = vmatpush1.bf16.xpose.msra.mxu0 %v1261
          %1265 = vmatprep.subr.bf16.mxu0 0
          %1266 = vmatpush1.bf16.xpose.msra.mxu0 0
          %1267 = vmatprep.subr.bf16.mxu0 0
          %1268 = vmatpush1.bf16.xpose.msra.mxu0 0
          %1269 = vmatprep.subr.bf16.mxu0 0
          %1270 = vmatpush1.bf16.xpose.msra.mxu0 0
          %1271 = vmatprep.subr.bf16.mxu0 0
          %1272 = vmatpush1.bf16.xpose.msra.mxu0 0
          %1273 = vmatprep.subr.bf16.mxu0 0
          %1274 = vmatpush1.bf16.xpose.msra.mxu0 0
          %1275 = vmatprep.subr.bf16.mxu0 0
          %1276 = vmatpush1.bf16.xpose.msra.mxu0 0
          %1277 = vmatprep.subr.bf16.mxu0 0
          %1278 = vmatpush1.bf16.xpose.msra.mxu0 0
          %1279 = vmatprep.subr.bf16.mxu0 0
          %1280 = vmatpush1.bf16.xpose.msra.mxu0 0
          %1281 = vmatprep.subr.bf16.mxu0 0
          %1282 = vmatpush1.bf16.xpose.msra.mxu0 0
          %1283 = vmatprep.subr.bf16.mxu0 0
          %1284 = vmatpush1.bf16.xpose.msra.mxu0 0
          %1285 = vmatprep.subr.bf16.mxu0 0
          %1286 = vmatpush1.bf16.xpose.msra.mxu0 0
          %1287 = vmatprep.subr.bf16.mxu0 0
          %1288 = vmatpush1.bf16.xpose.msra.mxu0 0
          %1289 = vmatprep.subr.bf16.mxu0 0
          %1290 = vmatpush1.bf16.xpose.msra.mxu0 0
          %1291 = vmatprep.subr.bf16.mxu0 0
          %1292 = vmatpush1.bf16.xpose.msra.mxu0 0
          %1293 = vmatprep.subr.bf16.mxu0 0
          %1294 = vmatpush1.bf16.xpose.msra.mxu0 0
          %1295 = vmatprep.mubr.bf16.mxu0 0
          %1296 = vmatmul.mubr.bf16.gmra.mrb[0].mxu0 %v1258
          %v1297 = vpop.f32.mrb[0].mxu0
          %v1298 = vadd.f32 %v685, %v1297
          %v1299 = vpop.f32.mrb[0].mxu0
          %v1300 = vpop.f32.mrb[0].mxu0
          %v1301 = vpop.f32.mrb[0].mxu0
          %1302 = vdwg.mxu0
          %v1303 = vsel %vm736, %v1298, -inf
          %1304 = vmax.xlane.f32.xlu0 %v1303
          %v1305 = vpop.xlane.xlu0 %1304
          %v1306 = vsub.f32 %v1298, %v1305
          %v1307 = vmul.f32 %v1306, 1.442695
          %v1308 = vpow.pop %v1307
          %v1309 = vsel %vm736, %v1308, 0.0
          %1310 = vadd.xlane.f32.xlu0 %v1309
          %v1311 = vpop.xlane.xlu0 %1310
          %v1312 = vrcp.pop %v1311
          %v1313 = vmul.f32 %v1308, %v1312
          %v1314 = vpack.c.bf16 %v1313, %v1313
          %1315 = vrot.lane.b32.xlu0 %v1206, 112
          %v1316 = vpop.permute.xlu0 %1315
          %v1318 = vsel %vm736, %v1314, 0
          %v1321 = vsel %vm752, %v1316, 0
          %1323 = vmatprep.subr.bf16.mxu0 0
          %1324 = vmatpush1.bf16.msra.mxu0 %v1321
          %1325 = vmatprep.subr.bf16.mxu0 0
          %1326 = vmatpush1.bf16.msra.mxu0 0
          %1327 = vmatprep.subr.bf16.mxu0 0
          %1328 = vmatpush1.bf16.msra.mxu0 0
          %1329 = vmatprep.subr.bf16.mxu0 0
          %1330 = vmatpush1.bf16.msra.mxu0 0
          %1331 = vmatprep.subr.bf16.mxu0 0
          %1332 = vmatpush1.bf16.msra.mxu0 0
          %1333 = vmatprep.subr.bf16.mxu0 0
          %1334 = vmatpush1.bf16.msra.mxu0 0
          %1335 = vmatprep.subr.bf16.mxu0 0
          %1336 = vmatpush1.bf16.msra.mxu0 0
          %1337 = vmatprep.subr.bf16.mxu0 0
          %1338 = vmatpush1.bf16.msra.mxu0 0
          %1339 = vmatprep.subr.bf16.mxu0 0
          %1340 = vmatpush1.bf16.msra.mxu0 0
          %1341 = vmatprep.subr.bf16.mxu0 0
          %1342 = vmatpush1.bf16.msra.mxu0 0
          %1343 = vmatprep.subr.bf16.mxu0 0
          %1344 = vmatpush1.bf16.msra.mxu0 0
          %1345 = vmatprep.subr.bf16.mxu0 0
          %1346 = vmatpush1.bf16.msra.mxu0 0
          %1347 = vmatprep.subr.bf16.mxu0 0
          %1348 = vmatpush1.bf16.msra.mxu0 0
          %1349 = vmatprep.subr.bf16.mxu0 0
          %1350 = vmatpush1.bf16.msra.mxu0 0
          %1351 = vmatprep.subr.bf16.mxu0 0
          %1352 = vmatpush1.bf16.msra.mxu0 0
          %1353 = vmatprep.subr.bf16.mxu0 0
          %1354 = vmatpush1.bf16.msra.mxu0 0
          %1355 = vmatprep.mubr.bf16.mxu0 0
          %1356 = vmatmul.mubr.bf16.gmra.mrb[0].mxu0 %v1318
          %v1357 = vpop.f32.mrb[0].mxu0
          %v1358 = vadd.f32 0.0, %v1357
          %v1359 = vpop.f32.mrb[0].mxu0
          %v1360 = vpop.f32.mrb[0].mxu0
          %v1361 = vpop.f32.mrb[0].mxu0
          %1362 = vdwg.mxu0
          %1363 = vrot.lane.b32.xlu0 %v1145, 96
          %v1364 = vpop.permute.xlu0 %1363
          %1365 = vrot.lane.b32.xlu0 %v1145, 32
          %v1366 = vpop.permute.xlu0 %1365
          %v1368 = vsel %vm689, %v1364, 0
          %v1371 = vsel %vm689, %v1366, 0
          %1373 = vmatprep.subr.bf16.mxu0 0
          %1374 = vmatpush1.bf16.xpose.msra.mxu0 %v1371
          %1375 = vmatprep.subr.bf16.mxu0 0
          %1376 = vmatpush1.bf16.xpose.msra.mxu0 0
          %1377 = vmatprep.subr.bf16.mxu0 0
          %1378 = vmatpush1.bf16.xpose.msra.mxu0 0
          %1379 = vmatprep.subr.bf16.mxu0 0
          %1380 = vmatpush1.bf16.xpose.msra.mxu0 0
          %1381 = vmatprep.subr.bf16.mxu0 0
          %1382 = vmatpush1.bf16.xpose.msra.mxu0 0
          %1383 = vmatprep.subr.bf16.mxu0 0
          %1384 = vmatpush1.bf16.xpose.msra.mxu0 0
          %1385 = vmatprep.subr.bf16.mxu0 0
          %1386 = vmatpush1.bf16.xpose.msra.mxu0 0
          %1387 = vmatprep.subr.bf16.mxu0 0
          %1388 = vmatpush1.bf16.xpose.msra.mxu0 0
          %1389 = vmatprep.subr.bf16.mxu0 0
          %1390 = vmatpush1.bf16.xpose.msra.mxu0 0
          %1391 = vmatprep.subr.bf16.mxu0 0
          %1392 = vmatpush1.bf16.xpose.msra.mxu0 0
          %1393 = vmatprep.subr.bf16.mxu0 0
          %1394 = vmatpush1.bf16.xpose.msra.mxu0 0
          %1395 = vmatprep.subr.bf16.mxu0 0
          %1396 = vmatpush1.bf16.xpose.msra.mxu0 0
          %1397 = vmatprep.subr.bf16.mxu0 0
          %1398 = vmatpush1.bf16.xpose.msra.mxu0 0
          %1399 = vmatprep.subr.bf16.mxu0 0
          %1400 = vmatpush1.bf16.xpose.msra.mxu0 0
          %1401 = vmatprep.subr.bf16.mxu0 0
          %1402 = vmatpush1.bf16.xpose.msra.mxu0 0
          %1403 = vmatprep.subr.bf16.mxu0 0
          %1404 = vmatpush1.bf16.xpose.msra.mxu0 0
          %1405 = vmatprep.mubr.bf16.mxu0 0
          %1406 = vmatmul.mubr.bf16.gmra.mrb[0].mxu0 %v1368
          %v1407 = vpop.f32.mrb[0].mxu0
          %v1408 = vadd.f32 %v685, %v1407
          %v1409 = vpop.f32.mrb[0].mxu0
          %v1410 = vpop.f32.mrb[0].mxu0
          %v1411 = vpop.f32.mrb[0].mxu0
          %1412 = vdwg.mxu0
          %v1413 = vsel %vm736, %v1408, -inf
          %1414 = vmax.xlane.f32.xlu0 %v1413
          %v1415 = vpop.xlane.xlu0 %1414
          %v1416 = vsub.f32 %v1408, %v1415
          %v1417 = vmul.f32 %v1416, 1.442695
          %v1418 = vpow.pop %v1417
          %v1419 = vsel %vm736, %v1418, 0.0
          %1420 = vadd.xlane.f32.xlu0 %v1419
          %v1421 = vpop.xlane.xlu0 %1420
          %v1422 = vrcp.pop %v1421
          %v1423 = vmul.f32 %v1418, %v1422
          %v1424 = vpack.c.bf16 %v1423, %v1423
          %1425 = vrot.lane.b32.xlu0 %v1206, 96
          %v1426 = vpop.permute.xlu0 %1425
          %v1428 = vsel %vm736, %v1424, 0
          %v1431 = vsel %vm752, %v1426, 0
          %1433 = vmatprep.subr.bf16.mxu0 0
          %1434 = vmatpush1.bf16.msra.mxu0 %v1431
          %1435 = vmatprep.subr.bf16.mxu0 0
          %1436 = vmatpush1.bf16.msra.mxu0 0
          %1437 = vmatprep.subr.bf16.mxu0 0
          %1438 = vmatpush1.bf16.msra.mxu0 0
          %1439 = vmatprep.subr.bf16.mxu0 0
          %1440 = vmatpush1.bf16.msra.mxu0 0
          %1441 = vmatprep.subr.bf16.mxu0 0
          %1442 = vmatpush1.bf16.msra.mxu0 0
          %1443 = vmatprep.subr.bf16.mxu0 0
          %1444 = vmatpush1.bf16.msra.mxu0 0
          %1445 = vmatprep.subr.bf16.mxu0 0
          %1446 = vmatpush1.bf16.msra.mxu0 0
          %1447 = vmatprep.subr.bf16.mxu0 0
          %1448 = vmatpush1.bf16.msra.mxu0 0
          %1449 = vmatprep.subr.bf16.mxu0 0
          %1450 = vmatpush1.bf16.msra.mxu0 0
          %1451 = vmatprep.subr.bf16.mxu0 0
          %1452 = vmatpush1.bf16.msra.mxu0 0
          %1453 = vmatprep.subr.bf16.mxu0 0
          %1454 = vmatpush1.bf16.msra.mxu0 0
          %1455 = vmatprep.subr.bf16.mxu0 0
          %1456 = vmatpush1.bf16.msra.mxu0 0
          %1457 = vmatprep.subr.bf16.mxu0 0
          %1458 = vmatpush1.bf16.msra.mxu0 0
          %1459 = vmatprep.subr.bf16.mxu0 0
          %1460 = vmatpush1.bf16.msra.mxu0 0
          %1461 = vmatprep.subr.bf16.mxu0 0
          %1462 = vmatpush1.bf16.msra.mxu0 0
          %1463 = vmatprep.subr.bf16.mxu0 0
          %1464 = vmatpush1.bf16.msra.mxu0 0
          %1465 = vmatprep.mubr.bf16.mxu0 0
          %1466 = vmatmul.mubr.bf16.gmra.mrb[0].mxu0 %v1428
          %v1467 = vpop.f32.mrb[0].mxu0
          %v1468 = vadd.f32 0.0, %v1467
          %v1469 = vpop.f32.mrb[0].mxu0
          %v1470 = vpop.f32.mrb[0].mxu0
          %v1471 = vpop.f32.mrb[0].mxu0
          %1472 = vdwg.mxu0
          %1473 = vrot.lane.b32.xlu0 %v1145, 80
          %v1474 = vpop.permute.xlu0 %1473
          %1475 = vrot.lane.b32.xlu0 %v1145, 16
          %v1476 = vpop.permute.xlu0 %1475
          %v1478 = vsel %vm689, %v1474, 0
          %v1481 = vsel %vm689, %v1476, 0
          %1483 = vmatprep.subr.bf16.mxu0 0
          %1484 = vmatpush1.bf16.xpose.msra.mxu0 %v1481
          %1485 = vmatprep.subr.bf16.mxu0 0
          %1486 = vmatpush1.bf16.xpose.msra.mxu0 0
          %1487 = vmatprep.subr.bf16.mxu0 0
          %1488 = vmatpush1.bf16.xpose.msra.mxu0 0
          %1489 = vmatprep.subr.bf16.mxu0 0
          %1490 = vmatpush1.bf16.xpose.msra.mxu0 0
          %1491 = vmatprep.subr.bf16.mxu0 0
          %1492 = vmatpush1.bf16.xpose.msra.mxu0 0
          %1493 = vmatprep.subr.bf16.mxu0 0
          %1494 = vmatpush1.bf16.xpose.msra.mxu0 0
          %1495 = vmatprep.subr.bf16.mxu0 0
          %1496 = vmatpush1.bf16.xpose.msra.mxu0 0
          %1497 = vmatprep.subr.bf16.mxu0 0
          %1498 = vmatpush1.bf16.xpose.msra.mxu0 0
          %1499 = vmatprep.subr.bf16.mxu0 0
          %1500 = vmatpush1.bf16.xpose.msra.mxu0 0
          %1501 = vmatprep.subr.bf16.mxu0 0
          %1502 = vmatpush1.bf16.xpose.msra.mxu0 0
          %1503 = vmatprep.subr.bf16.mxu0 0
          %1504 = vmatpush1.bf16.xpose.msra.mxu0 0
          %1505 = vmatprep.subr.bf16.mxu0 0
          %1506 = vmatpush1.bf16.xpose.msra.mxu0 0
          %1507 = vmatprep.subr.bf16.mxu0 0
          %1508 = vmatpush1.bf16.xpose.msra.mxu0 0
          %1509 = vmatprep.subr.bf16.mxu0 0
          %1510 = vmatpush1.bf16.xpose.msra.mxu0 0
          %1511 = vmatprep.subr.bf16.mxu0 0
          %1512 = vmatpush1.bf16.xpose.msra.mxu0 0
          %1513 = vmatprep.subr.bf16.mxu0 0
          %1514 = vmatpush1.bf16.xpose.msra.mxu0 0
          %1515 = vmatprep.mubr.bf16.mxu0 0
          %1516 = vmatmul.mubr.bf16.gmra.mrb[0].mxu0 %v1478
          %v1517 = vpop.f32.mrb[0].mxu0
          %v1518 = vadd.f32 %v685, %v1517
          %v1519 = vpop.f32.mrb[0].mxu0
          %v1520 = vpop.f32.mrb[0].mxu0
          %v1521 = vpop.f32.mrb[0].mxu0
          %1522 = vdwg.mxu0
          %v1523 = vsel %vm736, %v1518, -inf
          %1524 = vmax.xlane.f32.xlu0 %v1523
          %v1525 = vpop.xlane.xlu0 %1524
          %v1526 = vsub.f32 %v1518, %v1525
          %v1527 = vmul.f32 %v1526, 1.442695
          %v1528 = vpow.pop %v1527
          %v1529 = vsel %vm736, %v1528, 0.0
          %1530 = vadd.xlane.f32.xlu0 %v1529
          %v1531 = vpop.xlane.xlu0 %1530
          %v1532 = vrcp.pop %v1531
          %v1533 = vmul.f32 %v1528, %v1532
          %v1534 = vpack.c.bf16 %v1533, %v1533
          %1535 = vrot.lane.b32.xlu0 %v1206, 80
          %v1536 = vpop.permute.xlu0 %1535
          %v1538 = vsel %vm736, %v1534, 0
          %v1541 = vsel %vm752, %v1536, 0
          %1543 = vmatprep.subr.bf16.mxu0 0
          %1544 = vmatpush1.bf16.msra.mxu0 %v1541
          %1545 = vmatprep.subr.bf16.mxu0 0
          %1546 = vmatpush1.bf16.msra.mxu0 0
          %1547 = vmatprep.subr.bf16.mxu0 0
          %1548 = vmatpush1.bf16.msra.mxu0 0
          %1549 = vmatprep.subr.bf16.mxu0 0
          %1550 = vmatpush1.bf16.msra.mxu0 0
          %1551 = vmatprep.subr.bf16.mxu0 0
          %1552 = vmatpush1.bf16.msra.mxu0 0
          %1553 = vmatprep.subr.bf16.mxu0 0
          %1554 = vmatpush1.bf16.msra.mxu0 0
          %1555 = vmatprep.subr.bf16.mxu0 0
          %1556 = vmatpush1.bf16.msra.mxu0 0
          %1557 = vmatprep.subr.bf16.mxu0 0
          %1558 = vmatpush1.bf16.msra.mxu0 0
          %1559 = vmatprep.subr.bf16.mxu0 0
          %1560 = vmatpush1.bf16.msra.mxu0 0
          %1561 = vmatprep.subr.bf16.mxu0 0
          %1562 = vmatpush1.bf16.msra.mxu0 0
          %1563 = vmatprep.subr.bf16.mxu0 0
          %1564 = vmatpush1.bf16.msra.mxu0 0
          %1565 = vmatprep.subr.bf16.mxu0 0
          %1566 = vmatpush1.bf16.msra.mxu0 0
          %1567 = vmatprep.subr.bf16.mxu0 0
          %1568 = vmatpush1.bf16.msra.mxu0 0
          %1569 = vmatprep.subr.bf16.mxu0 0
          %1570 = vmatpush1.bf16.msra.mxu0 0
          %1571 = vmatprep.subr.bf16.mxu0 0
          %1572 = vmatpush1.bf16.msra.mxu0 0
          %1573 = vmatprep.subr.bf16.mxu0 0
          %1574 = vmatpush1.bf16.msra.mxu0 0
          %1575 = vmatprep.mubr.bf16.mxu0 0
          %1576 = vmatmul.mubr.bf16.gmra.mrb[0].mxu0 %v1538
          %v1577 = vpop.f32.mrb[0].mxu0
          %v1578 = vadd.f32 0.0, %v1577
          %v1579 = vpop.f32.mrb[0].mxu0
          %v1580 = vpop.f32.mrb[0].mxu0
          %v1581 = vpop.f32.mrb[0].mxu0
          %1582 = vdwg.mxu0
          %1584 = vrot.lane.b32.xlu0 %v1358, 16
          %v1585 = vpop.permute.xlu0 %1584
          %1588 = vrot.lane.b32.xlu0 %v1468, 32
          %v1589 = vpop.permute.xlu0 %1588
          %1592 = vrot.lane.b32.xlu0 %v1578, 48
          %v1593 = vpop.permute.xlu0 %1592
          %v1595 = vsel %vm689, %v1248, %v1585
          %v1596 = vsel %vm1140, %v1595, %v1589
          %v1597 = vsel %vm1142, %v1596, %v1593
          %v1598 = vadd.f32 %v524, %v1597
          %v1599 = vld [vmem:[%s5] sm:$0x1]
          %v1600 = vld [vmem:[%s6] sm:$0x1]
          %v1601 = vsel %vm527, %v1144, 0.0
          %1602 = vadd.xlane.f32.xlu0 %v1601
          %v1603 = vpop.xlane.xlu0 %1602
          %v1604 = vsel %vm527, %v1598, 0.0
          %1605 = vadd.xlane.f32.xlu0 %v1604
          %v1606 = vpop.xlane.xlu0 %1605
          %v1607 = vmul.f32 %v1603, %v534
          %v1608 = vmul.f32 %v1606, %v534
          %v1609 = vsub.f32 %v1144, %v1607
          %v1610 = vsub.f32 %v1598, %v1608
          %v1611 = vmul.f32 %v1609, %v1609
          %v1612 = vmul.f32 %v1610, %v1610
          %v1613 = vsel %vm527, %v1611, 0.0
          %1614 = vadd.xlane.f32.xlu0 %v1613
          %v1615 = vpop.xlane.xlu0 %1614
          %v1616 = vsel %vm527, %v1612, 0.0
          %1617 = vadd.xlane.f32.xlu0 %v1616
          %v1618 = vpop.xlane.xlu0 %1617
          %v1619 = vmul.f32 %v1615, %v534
          %v1620 = vmul.f32 %v1618, %v534
          %v1621 = vadd.f32 %v1619, 1e-05
          %v1622 = vadd.f32 %v1620, 1e-05
          %v1623 = vrsqrt.pop %v1621
          %v1624 = vrsqrt.pop %v1622
          %v1625 = vmul.f32 %v1609, %v1623
          %v1626 = vmul.f32 %v1610, %v1624
          %v1628 = vlaneseq
          %v1629 = vshrl.u32 %v1628, 7
          %v1630 = vsub.s32 0, %v1629
          %v1631 = vrot.slane %v1599, %v1630
          %v1633 = vmul.f32 %v1625, %v1631
          %v1634 = vmul.f32 %v1626, %v1631
          %v1636 = vlaneseq
          %v1637 = vshrl.u32 %v1636, 7
          %v1638 = vsub.s32 0, %v1637
          %v1639 = vrot.slane %v1600, %v1638
          %v1641 = vadd.f32 %v1633, %v1639
          %v1642 = vadd.f32 %v1634, %v1639
          %v1643 = vpack.c.bf16 %v1642, %v1641
          %1644 = vst.msk [vmem:[#allocation2] sm:$0xff] %vm527, %v1643
          %v1645 = vld [vmem:[%s10] sm:$0x1]
          %v1647 = vlaneseq
          %v1648 = vshrl.u32 %v1647, 7
          %v1649 = vsub.s32 0, %v1648
          %v1650 = vrot.slane %v1645, %v1649
          %v1652 = vadd.f32 %v1144, %v1650
          %v1653 = vadd.f32 %v1598, %v1650
          %1654 = vst.msk [vmem:[#allocation3] sm:$0xff] %vm527, %v1652
          %1655 = vst.msk [vmem:[#allocation3 + $0x8] sm:$0xff] %vm527, %v1653
        $region109: #{tpu_custom_call.1} parent=100 // pred_fallthru
          _
        %v1656 = vld [vmem:[#allocation2] sm:$0xff]
        %v1657 = vld [vmem:[%s457] sm:$0xf]
        %v1658 = vld [vmem:[%s457 + $0x4] sm:$0xf]
        %v1659 = vld [vmem:[%s457 + $0x8] sm:$0xf]
        %v1660 = vld [vmem:[%s457 + $0xc] sm:$0xf]
        %v1661 = vld [vmem:[%s457 + $0x10] sm:$0xf]
        %v1662 = vld [vmem:[%s457 + $0x14] sm:$0xf]
        %v1663 = vld [vmem:[%s457 + $0x18] sm:$0xf]
        %v1664 = vld [vmem:[%s457 + $0x1c] sm:$0xf]
        %v1665 = vld [vmem:[%s510] sm:$0x1]
        %v1667 = vlaneseq
        %v1668 = vshrl.u32 %v1667, 7
        %v1669 = vsub.s32 0, %v1668
        %v1670 = vrot.slane %v1665, %v1669
        %v1680 = vunpack.c.l.b16 %v1657
        %v1681 = vunpack.c.l.b16 %v1658
        %v1682 = vunpack.c.l.b16 %v1659
        %v1683 = vunpack.c.l.b16 %v1660
        %v1684 = vunpack.c.l.b16 %v1661
        %v1685 = vunpack.c.l.b16 %v1662
        %v1686 = vunpack.c.l.b16 %v1663
        %v1687 = vunpack.c.l.b16 %v1664
        %v1688 = vpack.c.b16 %v1681, %v1680
        %v1689 = vpack.c.b16 %v1683, %v1682
        %v1690 = vpack.c.b16 %v1685, %v1684
        %v1691 = vpack.c.b16 %v1687, %v1686
        %vm1696 = vcmask 523264
        %v1698 = vsel %vm1696, %v1656, 0
        %1700 = vmatprep.subr.bf16.mxu0 0
        %1701 = vmatpush1.bf16.msra.mxu0 %v1688
        %1702 = vmatprep.subr.bf16.mxu0 0
        %1703 = vmatpush1.bf16.msra.mxu0 %v1689
        %1704 = vmatprep.subr.bf16.mxu0 0
        %1705 = vmatpush1.bf16.msra.mxu0 %v1690
        %1706 = vmatprep.subr.bf16.mxu0 0
        %1707 = vmatpush1.bf16.msra.mxu0 %v1691
        %1708 = vmatprep.subr.bf16.mxu0 0
        %1709 = vmatpush1.bf16.msra.mxu0 0
        %1710 = vmatprep.subr.bf16.mxu0 0
        %1711 = vmatpush1.bf16.msra.mxu0 0
        %1712 = vmatprep.subr.bf16.mxu0 0
        %1713 = vmatpush1.bf16.msra.mxu0 0
        %1714 = vmatprep.subr.bf16.mxu0 0
        %1715 = vmatpush1.bf16.msra.mxu0 0
        %1716 = vmatprep.subr.bf16.mxu0 0
        %1717 = vmatpush1.bf16.msra.mxu0 0
        %1718 = vmatprep.subr.bf16.mxu0 0
        %1719 = vmatpush1.bf16.msra.mxu0 0
        %1720 = vmatprep.subr.bf16.mxu0 0
        %1721 = vmatpush1.bf16.msra.mxu0 0
        %1722 = vmatprep.subr.bf16.mxu0 0
        %1723 = vmatpush1.bf16.msra.mxu0 0
        %1724 = vmatprep.subr.bf16.mxu0 0
        %1725 = vmatpush1.bf16.msra.mxu0 0
        %1726 = vmatprep.subr.bf16.mxu0 0
        %1727 = vmatpush1.bf16.msra.mxu0 0
        %1728 = vmatprep.subr.bf16.mxu0 0
        %1729 = vmatpush1.bf16.msra.mxu0 0
        %1730 = vmatprep.subr.bf16.mxu0 0
        %1731 = vmatpush1.bf16.msra.mxu0 0
        %1732 = vmatprep.mubr.bf16.mxu0 0
        %1733 = vmatmul.mubr.bf16.gmra.mrb[0].mxu0 %v1698
        %v1734 = vpop.f32.mrb[0].mxu0
        %v1735 = vadd.f32 %v1670, %v1734
        %v1736 = vpop.f32.mrb[0].mxu0
        %v1737 = vpop.f32.mrb[0].mxu0
        %v1738 = vadd.f32 %v1670, %v1737
        %v1739 = vpop.f32.mrb[0].mxu0
        %1740 = vdwg.mxu0
        %v1741 = vmul.f32 %v1735, 0.5
        %v1742 = vmul.f32 %v1738, 0.5
        %v1743 = vmul.f32 %v1735, 0.70710677
        %v1744 = vmul.f32 %v1738, 0.70710677
        %vm1745 = vcmp.ge.f32.partialorder %v1743, 0.0
        %vm1746 = vcmp.ge.f32.partialorder %v1744, 0.0
        %v1747 = vsel %vm1745, 1.0, -1.0
        %v1748 = vsel %vm1746, 1.0, -1.0
        %v1749 = vand.u32 2147483647, %v1743
        %v1750 = vand.u32 2147483647, %v1744
        %v1751 = vmul.f32 %v1749, 0.3275911
        %v1752 = vmul.f32 %v1750, 0.3275911
        %v1753 = vadd.f32 %v1751, 1.0
        %v1754 = vadd.f32 %v1752, 1.0
        %v1755 = vrcp.pop %v1753
        %v1756 = vmul.f32 1.0, %v1755
        %v1757 = vrcp.pop %v1754
        %v1758 = vmul.f32 1.0, %v1757
        %v1759 = vmul.f32 %v1756, 1.0614054
        %v1760 = vmul.f32 %v1758, 1.0614054
        %v1761 = vadd.f32 %v1759, -1.4531521
        %v1762 = vadd.f32 %v1760, -1.4531521
        %v1763 = vmul.f32 %v1761, %v1756
        %v1764 = vmul.f32 %v1762, %v1758
        %v1765 = vadd.f32 %v1763, 1.4214138
        %v1766 = vadd.f32 %v1764, 1.4214138
        %v1767 = vmul.f32 %v1765, %v1756
        %v1768 = vmul.f32 %v1766, %v1758
        %v1769 = vadd.f32 %v1767, -0.28449672
        %v1770 = vadd.f32 %v1768, -0.28449672
        %v1771 = vmul.f32 %v1769, %v1756
        %v1772 = vmul.f32 %v1770, %v1758
        %v1773 = vadd.f32 %v1771, 0.2548296
        %v1774 = vadd.f32 %v1772, 0.2548296
        %v1775 = vmul.f32 %v1773, %v1756
        %v1776 = vmul.f32 %v1774, %v1758
        %v1777 = vsub.f32 0.0, %v1749
        %v1778 = vsub.f32 0.0, %v1750
        %v1779 = vmul.f32 %v1777, %v1749
        %v1780 = vmul.f32 %v1778, %v1750
        %v1781 = vmul.f32 %v1779, 1.442695
        %v1782 = vpow.pop %v1781
        %v1783 = vmul.f32 %v1780, 1.442695
        %v1784 = vpow.pop %v1783
        %v1785 = vmul.f32 %v1775, %v1782
        %v1786 = vmul.f32 %v1776, %v1784
        %v1787 = vsub.f32 1.0, %v1785
        %v1788 = vsub.f32 1.0, %v1786
        %v1789 = vmul.f32 %v1747, %v1787
        %v1790 = vmul.f32 %v1748, %v1788
        %v1791 = vadd.f32 %v1789, 1.0
        %v1792 = vadd.f32 %v1790, 1.0
        %v1793 = vmul.f32 %v1741, %v1791
        %v1794 = vmul.f32 %v1742, %v1792
        %v1795 = vld [vmem:[#allocation3] sm:$0xff]
        %v1796 = vld [vmem:[#allocation3 + $0x8] sm:$0xff]
        %v1797 = vpack.c.bf16 %v1794, %v1793
        %v1798 = vld [vmem:[%s515] sm:$0xf]
        %v1799 = vld [vmem:[%s515 + $0x4] sm:$0xf]
        %v1800 = vld [vmem:[%s515 + $0x8] sm:$0xf]
        %v1801 = vld [vmem:[%s515 + $0xc] sm:$0xf]
        %v1802 = vld [vmem:[%s515 + $0x10] sm:$0xf]
        %v1803 = vld [vmem:[%s515 + $0x14] sm:$0xf]
        %v1804 = vld [vmem:[%s515 + $0x18] sm:$0xf]
        %v1805 = vld [vmem:[%s515 + $0x1c] sm:$0xf]
        %v1806 = vld [vmem:[%s515 + $0x20] sm:$0xf]
        %v1807 = vld [vmem:[%s515 + $0x24] sm:$0xf]
        %v1808 = vld [vmem:[%s515 + $0x28] sm:$0xf]
        %v1809 = vld [vmem:[%s515 + $0x2c] sm:$0xf]
        %v1810 = vld [vmem:[%s515 + $0x30] sm:$0xf]
        %v1811 = vld [vmem:[%s515 + $0x34] sm:$0xf]
        %v1812 = vld [vmem:[%s515 + $0x38] sm:$0xf]
        %v1813 = vld [vmem:[%s515 + $0x3c] sm:$0xf]
        %v1830 = vunpack.c.l.b16 %v1798
        %v1831 = vunpack.c.l.b16 %v1799
        %v1832 = vunpack.c.l.b16 %v1800
        %v1833 = vunpack.c.l.b16 %v1801
        %v1834 = vunpack.c.l.b16 %v1802
        %v1835 = vunpack.c.l.b16 %v1803
        %v1836 = vunpack.c.l.b16 %v1804
        %v1837 = vunpack.c.l.b16 %v1805
        %v1838 = vunpack.c.l.b16 %v1806
        %v1839 = vunpack.c.l.b16 %v1807
        %v1840 = vunpack.c.l.b16 %v1808
        %v1841 = vunpack.c.l.b16 %v1809
        %v1842 = vunpack.c.l.b16 %v1810
        %v1843 = vunpack.c.l.b16 %v1811
        %v1844 = vunpack.c.l.b16 %v1812
        %v1845 = vunpack.c.l.b16 %v1813
        %v1846 = vpack.c.b16 %v1831, %v1830
        %v1847 = vpack.c.b16 %v1833, %v1832
        %v1848 = vpack.c.b16 %v1835, %v1834
        %v1849 = vpack.c.b16 %v1837, %v1836
        %v1850 = vpack.c.b16 %v1839, %v1838
        %v1851 = vpack.c.b16 %v1841, %v1840
        %v1852 = vpack.c.b16 %v1843, %v1842
        %v1853 = vpack.c.b16 %v1845, %v1844
        %1862 = vmatprep.subr.bf16.mxu0 0
        %1863 = vmatpush1.bf16.msra.mxu0 %v1846
        %1864 = vmatprep.subr.bf16.mxu0 0
        %1865 = vmatpush1.bf16.msra.mxu0 %v1847
        %1866 = vmatprep.subr.bf16.mxu0 0
        %1867 = vmatpush1.bf16.msra.mxu0 %v1848
        %1868 = vmatprep.subr.bf16.mxu0 0
        %1869 = vmatpush1.bf16.msra.mxu0 %v1849
        %1870 = vmatprep.subr.bf16.mxu0 0
        %1871 = vmatpush1.bf16.msra.mxu0 %v1850
        %1872 = vmatprep.subr.bf16.mxu0 0
        %1873 = vmatpush1.bf16.msra.mxu0 %v1851
        %1874 = vmatprep.subr.bf16.mxu0 0
        %1875 = vmatpush1.bf16.msra.mxu0 %v1852
        %1876 = vmatprep.subr.bf16.mxu0 0
        %1877 = vmatpush1.bf16.msra.mxu0 %v1853
        %1878 = vmatprep.subr.bf16.mxu0 0
        %1879 = vmatpush1.bf16.msra.mxu0 0
        %1880 = vmatprep.subr.bf16.mxu0 0
        %1881 = vmatpush1.bf16.msra.mxu0 0
        %1882 = vmatprep.subr.bf16.mxu0 0
        %1883 = vmatpush1.bf16.msra.mxu0 0
        %1884 = vmatprep.subr.bf16.mxu0 0
        %1885 = vmatpush1.bf16.msra.mxu0 0
        %1886 = vmatprep.subr.bf16.mxu0 0
        %1887 = vmatpush1.bf16.msra.mxu0 0
        %1888 = vmatprep.subr.bf16.mxu0 0
        %1889 = vmatpush1.bf16.msra.mxu0 0
        %1890 = vmatprep.subr.bf16.mxu0 0
        %1891 = vmatpush1.bf16.msra.mxu0 0
        %1892 = vmatprep.subr.bf16.mxu0 0
        %1893 = vmatpush1.bf16.msra.mxu0 0
        %1894 = vmatprep.mubr.bf16.mxu0 0
        %1895 = vmatmul.mubr.bf16.gmra.mrb[0].mxu0 %v1797
        %v1896 = vpop.f32.mrb[0].mxu0
        %v1897 = vadd.f32 0.0, %v1896
        %v1898 = vpop.f32.mrb[0].mxu0
        %v1899 = vpop.f32.mrb[0].mxu0
        %v1900 = vadd.f32 0.0, %v1899
        %v1901 = vpop.f32.mrb[0].mxu0
        %1902 = vdwg.mxu0
        %v1903 = vadd.f32 %v1795, %v1897
        %v1904 = vadd.f32 %v1796, %v1900
        %1905 = vst.msk [vmem:[#allocation3] sm:$0xff] %vm1696, %v1903
        %1906 = vst.msk [vmem:[#allocation3 + $0x8] sm:$0xff] %vm1696, %v1904
        %p1907 = scmp.eq.s32.totalorder %s28, 1
        // Predicated region
        $region110: #{tpu_custom_call.1} parent=100 // pred_check
          %p1908 = pneg %p1907
        $region111: #{tpu_custom_call.1} parent=100 // pred_check_branch
          %1910 = sbr.rel (%p1908) target = $region113
        $region112: #{tpu_custom_call.1} parent=100 // pred_region
          %v1911 = vld [vmem:[#allocation3] sm:$0xff]
          %v1912 = vld [vmem:[#allocation3 + $0x8] sm:$0xff]
          %1913 = vst.msk [vmem:[#allocation5] sm:$0xff] %vm1696, %v1911
          %1914 = vst.msk [vmem:[#allocation5 + $0x8] sm:$0xff] %vm1696, %v1912
        $region113: #{tpu_custom_call.1} parent=100 // pred_fallthru
          _
        // Predicated region
        $region114: #{tpu_custom_call.1} parent=100 // pred_check
          %p1915 = pneg %p304
        $region115: #{tpu_custom_call.1} parent=100 // pred_check_branch
          %1917 = sbr.rel (%p1915) target = $region117
        $region116: #{tpu_custom_call.1} parent=100 // pred_region
          %s1918 = smul.u32 2, %s27
          %s1920 = ssub.s32 256, 256
          %1921 = vsyncadd [#allocation6], %s1920
          %s1922 = smul.addr %s1918, 128
          %s1923 = scalar_lea.hbm %s11, %s1922
          %s1924 = sshll.u32 [#allocation5], 4
          %s1925 = int_to_ptr.vmem [resolvable:$true] %s1924
          %1930 = dma.vmem_to_hbm [thread:$0]  %s1925, 256, %s1923, [#allocation6], 128, 128, 8
        $region117: #{tpu_custom_call.1} parent=100 // pred_fallthru
          _
        // Predicated region
        $region118: #{tpu_custom_call.1} parent=100 // pred_check
          %p1931 = pneg %p304
        $region119: #{tpu_custom_call.1} parent=100 // pred_check_branch
          %1933 = sbr.rel (%p1931) target = $region121
        $region120: #{tpu_custom_call.1} parent=100 // pred_region
          %1934 = dma.done [#allocation6], 256
        $region121: #{tpu_custom_call.1} parent=100 // pred_fallthru
          _
      $region101: #{tpu_custom_call.1} parent=5 // pred_fallthru
        _
      %p1935 = scmp.le.s32.totalorder 2, %s18
      // Predicated region
      $region122: #{tpu_custom_call.1} parent=5 // pred_check
        %p1936 = pneg %p1935
      $region123: #{tpu_custom_call.1} parent=5 // pred_check_branch
        %1938 = sbr.rel (%p1936) target = $region125
      $region124: #{tpu_custom_call.1} parent=5 // pred_region
        %s1939 = ssub.s32 %s18, 2
      $region125: #{tpu_custom_call.1} parent=5 // pred_fallthru
        _
    $region6: #{tpu_custom_call.1} parent=1 // loop_footer
      %s22 = sadd.s32 1, %s18
    $region7: #{tpu_custom_call.1} parent=1 // loop_footer_branch
      %17 = sbr.rel target = $region3
    $region8: #{tpu_custom_call.1} parent=1 // loop_exit
      _
    %1940 = vsyncpa [#allocation6], 1
    %s1941 = scalar_lea.sflag [#allocation6], 1
    %1942 = vsyncpa %s1941, 1

</llo_original>
